<compile_context>
chip_gen: v6e
topology: v6e:2x2x1
jax: 0.10.0
libtpu: 0.0.40
codegen_flags: <defaults>
</compile_context>

<pallas_src>
import math

import jax
import jax.numpy as jnp
from jax.experimental import pallas as pl
from jax.experimental.pallas import tpu as pltpu

# Small, module-consistent shapes.
T, B, E, H, FFN = 8, 2, 32, 4, 64          # seq, batch, embed, heads, ffn dim
DH = E // H
N = T * B
EPS = 1e-5                                  # LayerNorm default eps
NEG = -1e9                                  # finite "-inf": exp underflows to 0

# ---- packed parameter-slab layout (one DMA for every weight / bias / LN) ----
# All matrices are stored pre-transposed to (in, out) and start at lane col 0.
P_COLS = 128
R_WQKV = 0                  # rows [0:E)        cols [0:3E)   in_proj_w.T (q cols pre-scaled)
R_FC1  = E                  # rows [E:2E)       cols [0:FFN)  fc1_w.T
R_FC2  = 2 * E              # rows [2E:2E+FFN)  cols [0:E)    fc2_w.T
R_WO   = 2 * E + FFN        # rows [..:..+E)    cols [0:E)    out_proj_w.T
R_VEC  = R_WO + E           # 8 vector rows: biases + LN params
P_ROWS = R_VEC + 8          # 168
V_BQKV, V_BO, V_B1, V_B2, V_G1, V_BE1, V_G2, V_BE2 = range(8)


# ----------------------------- Pallas kernel ---------------------------------

def _layer_norm(y, g, b):
    mu = jnp.mean(y, axis=-1, keepdims=True)
    var = jnp.mean(jnp.square(y - mu), axis=-1, keepdims=True)
    return (y - mu) * jax.lax.rsqrt(var + EPS) * g + b


def _encoder_layer_kernel(x_ref, bias_ref, p_ref, o_ref):
    x = x_ref[...]                                           # (N, E), row = t*B + b
    bias = bias_ref[...]                                     # (N, N) additive mask

    # ---- static slices of the packed parameter slab -------------------------
    wqkv = p_ref[R_WQKV:R_WQKV + E, 0:3 * E]                 # (E, 3E)
    w1   = p_ref[R_FC1:R_FC1 + E, 0:FFN]                     # (E, FFN)
    w2   = p_ref[R_FC2:R_FC2 + FFN, 0:E]                     # (FFN, E)
    wo   = p_ref[R_WO:R_WO + E, 0:E]                         # (E, E)
    bqkv = p_ref[R_VEC + V_BQKV:R_VEC + V_BQKV + 1, 0:3 * E]
    bo   = p_ref[R_VEC + V_BO:R_VEC + V_BO + 1, 0:E]
    b1   = p_ref[R_VEC + V_B1:R_VEC + V_B1 + 1, 0:FFN]
    b2   = p_ref[R_VEC + V_B2:R_VEC + V_B2 + 1, 0:E]
    g1   = p_ref[R_VEC + V_G1:R_VEC + V_G1 + 1, 0:E]
    be1  = p_ref[R_VEC + V_BE1:R_VEC + V_BE1 + 1, 0:E]
    g2   = p_ref[R_VEC + V_G2:R_VEC + V_G2 + 1, 0:E]
    be2  = p_ref[R_VEC + V_BE2:R_VEC + V_BE2 + 1, 0:E]

    # ---- fused QKV projection (q columns pre-scaled by 1/sqrt(DH)) ----------
    qkv = jnp.dot(x, wqkv, preferred_element_type=jnp.float32) + bqkv   # (N, 3E)

    # ---- multi-head attention; heads are static column slices ---------------
    heads = []
    for h in range(H):                                       # H = 4, unrolled
        lo = h * DH
        q = qkv[:, lo:lo + DH]                               # (N, DH)
        k = qkv[:, E + lo:E + lo + DH]
        v = qkv[:, 2 * E + lo:2 * E + lo + DH]
        s = jax.lax.dot_general(q, k, (((1,), (1,)), ((), ())),
                                preferred_element_type=jnp.float32)     # (N, N)
        s = s + bias
        m = jnp.max(s, axis=-1, keepdims=True)
        p = jnp.exp(s - m)
        p = p / jnp.sum(p, axis=-1, keepdims=True)           # exact softmax
        heads.append(jnp.dot(p, v, preferred_element_type=jnp.float32))
    attn = jnp.concatenate(heads, axis=-1)                   # (N, E), head h at cols h*DH
    # single out-projection matmul (depth E) instead of 4 depth-DH matmuls
    attn = jnp.dot(attn, wo, preferred_element_type=jnp.float32) + bo

    # ---- residual + LayerNorm 1 (post-norm; dropout = identity in eval) -----
    x1 = _layer_norm(attn + x, g1, be1)

    # ---- FFN (relu_dropout = identity) + residual + LayerNorm 2 -------------
    hid = jnp.maximum(jnp.dot(x1, w1, preferred_element_type=jnp.float32) + b1, 0.0)
    y = jnp.dot(hid, w2, preferred_element_type=jnp.float32) + b2
    o_ref[...] = _layer_norm(y + x1, g2, be2).astype(o_ref.dtype)


# ------------------------------- wrapper --------------------------------------

def _vmem():
    return pl.BlockSpec(memory_space=pltpu.MemorySpace.VMEM)


@jax.jit
def transformer_encoder_layer(x, pad_mask, param_slab):
    """x: (T, B, E) f32; pad_mask: (B, T) bool (True = pad); param_slab: packed params."""
    t_, b_, e_ = x.shape
    n = t_ * b_
    x2d = x.reshape(n, e_)                                   # row = t*B + b (free)

    # Additive attention bias, built once in the wrapper (tiny, XLA-fused):
    # 0 where (same sequence AND key not padded), else NEG.
    bid = jnp.arange(n, dtype=jnp.int32) % b_                # batch id per row
    same = bid[:, None] == bid[None, :]
    keypad = pad_mask.T.reshape(n)                           # key-row padding flag
    bias = jnp.where(same & ~keypad[None, :], 0.0, NEG).astype(x.dtype)  # (N, N)

    out = pl.pallas_call(
        _encoder_layer_kernel,
        out_shape=jax.ShapeDtypeStruct((n, e_), x.dtype),
        in_specs=[_vmem(), _vmem(), _vmem()],
        out_specs=_vmem(),
        input_output_aliases={0: 0},                         # reuse x2d's HBM buffer
    )(x2d, bias, param_slab)
    return out.reshape(t_, b_, e_)


# ----------------------------- params & reference ----------------------------

def _xavier_uniform(key, out_f, in_f):
    limit = math.sqrt(6.0 / (in_f + out_f))
    return jax.random.uniform(key, (out_f, in_f), jnp.float32, -limit, limit)


def init_params(key):
    ks = jax.random.split(key, 4)
    return {
        'in_proj_w': _xavier_uniform(ks[0], 3 * E, E),
        'in_proj_b': jnp.zeros((3 * E,), jnp.float32),
        'out_proj_w': _xavier_uniform(ks[1], E, E),
        'out_proj_b': jnp.zeros((E,), jnp.float32),
        'fc1_w': _xavier_uniform(ks[2], FFN, E),
        'fc1_b': jnp.zeros((FFN,), jnp.float32),
        'fc2_w': _xavier_uniform(ks[3], E, FFN),
        'fc2_b': jnp.zeros((E,), jnp.float32),
        'ln1_g': jnp.ones((E,), jnp.float32),
        'ln1_b': jnp.zeros((E,), jnp.float32),
        'ln2_g': jnp.ones((E,), jnp.float32),
        'ln2_b': jnp.zeros((E,), jnp.float32),
    }


def prepare_params(p):
    """One-time packing of all layer parameters into a single lane-aligned f32
    slab (one HBM->VMEM DMA): weights pre-transposed to (in, out); the
    1/sqrt(DH) query scale folded into the q part of the fused in-projection."""
    scale = DH ** -0.5
    wqkv = p['in_proj_w'].at[:E].multiply(scale)             # (3E, E), q rows scaled
    bqkv = p['in_proj_b'].at[:E].multiply(scale)             # (3E,)
    slab = jnp.zeros((P_ROWS, P_COLS), jnp.float32)
    slab = slab.at[R_WQKV:R_WQKV + E, 0:3 * E].set(wqkv.T)
    slab = slab.at[R_FC1:R_FC1 + E, 0:FFN].set(p['fc1_w'].T)
    slab = slab.at[R_FC2:R_FC2 + FFN, 0:E].set(p['fc2_w'].T)
    slab = slab.at[R_WO:R_WO + E, 0:E].set(p['out_proj_w'].T)
    slab = slab.at[R_VEC + V_BQKV, 0:3 * E].set(bqkv)
    slab = slab.at[R_VEC + V_BO, 0:E].set(p['out_proj_b'])
    slab = slab.at[R_VEC + V_B1, 0:FFN].set(p['fc1_b'])
    slab = slab.at[R_VEC + V_B2, 0:E].set(p['fc2_b'])
    slab = slab.at[R_VEC + V_G1, 0:E].set(p['ln1_g'])
    slab = slab.at[R_VEC + V_BE1, 0:E].set(p['ln1_b'])
    slab = slab.at[R_VEC + V_G2, 0:E].set(p['ln2_g'])
    slab = slab.at[R_VEC + V_BE2, 0:E].set(p['ln2_b'])
    return slab


def reference_forward(x, pad_mask, p):
    t_, b_, e_ = x.shape
    x2d = x.reshape(t_ * b_, e_)

    def ln(y, g, bb):
        mu = y.mean(-1, keepdims=True)
        var = ((y - mu) ** 2).mean(-1, keepdims=True)
        return (y - mu) / jnp.sqrt(var + EPS) * g + bb

    residual = x2d
    qkv = x2d @ p['in_proj_w'].T + p['in_proj_b']
    qkv = qkv.reshape(t_, b_, 3, H, DH)
    q = jnp.transpose(qkv[:, :, 0], (1, 2, 0, 3)) * (DH ** -0.5)
    k = jnp.transpose(qkv[:, :, 1], (1, 2, 0, 3))
    v = jnp.transpose(qkv[:, :, 2], (1, 2, 0, 3))
    s = jnp.einsum('bhtd,bhsd->bhts', q, k)
    s = jnp.where(pad_mask[:, None, None, :], -jnp.inf, s)
    attn = jnp.einsum('bhts,bhsd->bhtd', jax.nn.softmax(s, axis=-1), v)
    attn = jnp.transpose(attn, (2, 0, 1, 3)).reshape(t_ * b_, e_)
    attn = attn @ p['out_proj_w'].T + p['out_proj_b']
    x2d = ln(residual + attn, p['ln1_g'], p['ln1_b'])

    residual = x2d
    h = jnp.maximum(x2d @ p['fc1_w'].T + p['fc1_b'], 0.0)
    y = h @ p['fc2_w'].T + p['fc2_b']
    x2d = ln(residual + y, p['ln2_g'], p['ln2_b'])
    return x2d.reshape(t_, b_, e_)


# ---------------------------------- main --------------------------------------

if __name__ == "__main__":
    key = jax.random.PRNGKey(0)
    kx, kparam = jax.random.split(key)
    params = init_params(kparam)
    param_slab = prepare_params(params)

    x = jax.random.normal(kx, (T, B, E), jnp.float32)
    # batch 1 has its last two timesteps padded
    pad_mask = jnp.zeros((B, T), dtype=jnp.bool_).at[1, T - 2:].set(True)

    out = transformer_encoder_layer(x, pad_mask, param_slab)
    out = jax.block_until_ready(out)

    ref = reference_forward(x, pad_mask, params)
    assert out.shape == (T, B, E) and out.dtype == jnp.float32
    max_err = float(jnp.max(jnp.abs(out - ref)))
    if not bool(jnp.allclose(out, ref, atol=1e-3, rtol=1e-3)):
        raise AssertionError(
            f"Pallas output mismatch vs JAX reference (max |err| = {max_err})")

    # TODO(synk): training-mode dropout (F.dropout / jit_dropout_add RNG) is not
    # implemented; eval-mode semantics (identity) are reproduced exactly.
    print("KERNEL_OK")
</pallas_src>

<mosaic_0001>
module attributes {stable_mosaic.version = 11 : i64} {
  func.func @_encoder_layer_kernel(%arg0: memref<16x32xf32, #tpu.memory_space<vmem>>, %arg1: memref<16x16xf32, #tpu.memory_space<vmem>>, %arg2: memref<168x128xf32, #tpu.memory_space<vmem>>, %arg3: memref<16x32xf32, #tpu.memory_space<vmem>>) attributes {dimension_semantics = [], scalar_prefetch = 0 : i64, scratch_operands = 0 : i64, tpu.core_type = #tpu.core_type<tc>} {
    %c0 = arith.constant 0 : index
    %c0_0 = arith.constant 0 : index
    %0 = vector.load %arg0[%c0, %c0_0] : memref<16x32xf32, #tpu.memory_space<vmem>>, vector<16x32xf32>
    %c0_1 = arith.constant 0 : index
    %c0_2 = arith.constant 0 : index
    %1 = vector.load %arg1[%c0_1, %c0_2] : memref<16x16xf32, #tpu.memory_space<vmem>>, vector<16x16xf32>
    %c0_3 = arith.constant 0 : index
    %c0_4 = arith.constant 0 : index
    %2 = vector.load %arg2[%c0_3, %c0_4] : memref<168x128xf32, #tpu.memory_space<vmem>>, vector<32x96xf32>
    %c32 = arith.constant 32 : index
    %c0_5 = arith.constant 0 : index
    %3 = vector.load %arg2[%c32, %c0_5] : memref<168x128xf32, #tpu.memory_space<vmem>>, vector<32x64xf32>
    %c64 = arith.constant 64 : index
    %c0_6 = arith.constant 0 : index
    %4 = vector.load %arg2[%c64, %c0_6] : memref<168x128xf32, #tpu.memory_space<vmem>>, vector<64x32xf32>
    %c128 = arith.constant 128 : index
    %c0_7 = arith.constant 0 : index
    %5 = vector.load %arg2[%c128, %c0_7] : memref<168x128xf32, #tpu.memory_space<vmem>>, vector<32x32xf32>
    %c160 = arith.constant 160 : index
    %c0_8 = arith.constant 0 : index
    %6 = vector.load %arg2[%c160, %c0_8] : memref<168x128xf32, #tpu.memory_space<vmem>>, vector<1x96xf32>
    %c161 = arith.constant 161 : index
    %c0_9 = arith.constant 0 : index
    %7 = vector.load %arg2[%c161, %c0_9] : memref<168x128xf32, #tpu.memory_space<vmem>>, vector<1x32xf32>
    %c162 = arith.constant 162 : index
    %c0_10 = arith.constant 0 : index
    %8 = vector.load %arg2[%c162, %c0_10] : memref<168x128xf32, #tpu.memory_space<vmem>>, vector<1x64xf32>
    %c163 = arith.constant 163 : index
    %c0_11 = arith.constant 0 : index
    %9 = vector.load %arg2[%c163, %c0_11] : memref<168x128xf32, #tpu.memory_space<vmem>>, vector<1x32xf32>
    %c164 = arith.constant 164 : index
    %c0_12 = arith.constant 0 : index
    %10 = vector.load %arg2[%c164, %c0_12] : memref<168x128xf32, #tpu.memory_space<vmem>>, vector<1x32xf32>
    %c165 = arith.constant 165 : index
    %c0_13 = arith.constant 0 : index
    %11 = vector.load %arg2[%c165, %c0_13] : memref<168x128xf32, #tpu.memory_space<vmem>>, vector<1x32xf32>
    %c166 = arith.constant 166 : index
    %c0_14 = arith.constant 0 : index
    %12 = vector.load %arg2[%c166, %c0_14] : memref<168x128xf32, #tpu.memory_space<vmem>>, vector<1x32xf32>
    %c167 = arith.constant 167 : index
    %c0_15 = arith.constant 0 : index
    %13 = vector.load %arg2[%c167, %c0_15] : memref<168x128xf32, #tpu.memory_space<vmem>>, vector<1x32xf32>
    %cst = arith.constant dense<0.000000e+00> : vector<16x96xf32>
    %14 = tpu.matmul %0, %2, %cst {dimension_numbers = #tpu.dot_dimension_numbers<[1], [0], [0], [1], [0, 0, 1, 1], [], []>} : vector<16x32xf32>, vector<32x96xf32>, vector<16x96xf32> -> vector<16x96xf32>
    %15 = vector.broadcast %6 : vector<1x96xf32> to vector<16x96xf32>
    %16 = arith.addf %14, %15 : vector<16x96xf32>
    %17 = vector.extract_strided_slice %16 {offsets = [0, 0], sizes = [16, 8], strides = [1, 1]} : vector<16x96xf32> to vector<16x8xf32>
    %18 = vector.extract_strided_slice %16 {offsets = [0, 32], sizes = [16, 8], strides = [1, 1]} : vector<16x96xf32> to vector<16x8xf32>
    %19 = vector.extract_strided_slice %16 {offsets = [0, 64], sizes = [16, 8], strides = [1, 1]} : vector<16x96xf32> to vector<16x8xf32>
    %cst_16 = arith.constant dense<0.000000e+00> : vector<16x16xf32>
    %20 = tpu.matmul %17, %18, %cst_16 {dimension_numbers = #tpu.dot_dimension_numbers<[1], [1], [0], [0], [0, 0, 1, 0], [], []>} : vector<16x8xf32>, vector<16x8xf32>, vector<16x16xf32> -> vector<16x16xf32>
    %21 = arith.addf %20, %1 : vector<16x16xf32>
    %cst_17 = arith.constant dense<0xFF800000> : vector<16xf32>
    %22 = vector.multi_reduction <maximumf>, %21, %cst_17 [1] : vector<16x16xf32> to vector<16xf32>
    %23 = vector.shape_cast %22 : vector<16xf32> to vector<16x1xf32>
    %24 = vector.broadcast %23 : vector<16x1xf32> to vector<16x16xf32>
    %25 = arith.subf %21, %24 : vector<16x16xf32>
    %26 = math.exp %25 : vector<16x16xf32>
    %cst_18 = arith.constant dense<0.000000e+00> : vector<16xf32>
    %27 = vector.multi_reduction <add>, %26, %cst_18 [1] : vector<16x16xf32> to vector<16xf32>
    %28 = vector.shape_cast %27 : vector<16xf32> to vector<16x1xf32>
    %29 = vector.broadcast %28 : vector<16x1xf32> to vector<16x16xf32>
    %30 = arith.divf %26, %29 : vector<16x16xf32>
    %cst_19 = arith.constant dense<0.000000e+00> : vector<16x8xf32>
    %31 = tpu.matmul %30, %19, %cst_19 {dimension_numbers = #tpu.dot_dimension_numbers<[1], [0], [0], [1], [0, 0, 1, 1], [], []>} : vector<16x16xf32>, vector<16x8xf32>, vector<16x8xf32> -> vector<16x8xf32>
    %32 = vector.extract_strided_slice %16 {offsets = [0, 8], sizes = [16, 8], strides = [1, 1]} : vector<16x96xf32> to vector<16x8xf32>
    %33 = vector.extract_strided_slice %16 {offsets = [0, 40], sizes = [16, 8], strides = [1, 1]} : vector<16x96xf32> to vector<16x8xf32>
    %34 = vector.extract_strided_slice %16 {offsets = [0, 72], sizes = [16, 8], strides = [1, 1]} : vector<16x96xf32> to vector<16x8xf32>
    %cst_20 = arith.constant dense<0.000000e+00> : vector<16x16xf32>
    %35 = tpu.matmul %32, %33, %cst_20 {dimension_numbers = #tpu.dot_dimension_numbers<[1], [1], [0], [0], [0, 0, 1, 0], [], []>} : vector<16x8xf32>, vector<16x8xf32>, vector<16x16xf32> -> vector<16x16xf32>
    %36 = arith.addf %35, %1 : vector<16x16xf32>
    %cst_21 = arith.constant dense<0xFF800000> : vector<16xf32>
    %37 = vector.multi_reduction <maximumf>, %36, %cst_21 [1] : vector<16x16xf32> to vector<16xf32>
    %38 = vector.shape_cast %37 : vector<16xf32> to vector<16x1xf32>
    %39 = vector.broadcast %38 : vector<16x1xf32> to vector<16x16xf32>
    %40 = arith.subf %36, %39 : vector<16x16xf32>
    %41 = math.exp %40 : vector<16x16xf32>
    %cst_22 = arith.constant dense<0.000000e+00> : vector<16xf32>
    %42 = vector.multi_reduction <add>, %41, %cst_22 [1] : vector<16x16xf32> to vector<16xf32>
    %43 = vector.shape_cast %42 : vector<16xf32> to vector<16x1xf32>
    %44 = vector.broadcast %43 : vector<16x1xf32> to vector<16x16xf32>
    %45 = arith.divf %41, %44 : vector<16x16xf32>
    %cst_23 = arith.constant dense<0.000000e+00> : vector<16x8xf32>
    %46 = tpu.matmul %45, %34, %cst_23 {dimension_numbers = #tpu.dot_dimension_numbers<[1], [0], [0], [1], [0, 0, 1, 1], [], []>} : vector<16x16xf32>, vector<16x8xf32>, vector<16x8xf32> -> vector<16x8xf32>
    %47 = vector.extract_strided_slice %16 {offsets = [0, 16], sizes = [16, 8], strides = [1, 1]} : vector<16x96xf32> to vector<16x8xf32>
    %48 = vector.extract_strided_slice %16 {offsets = [0, 48], sizes = [16, 8], strides = [1, 1]} : vector<16x96xf32> to vector<16x8xf32>
    %49 = vector.extract_strided_slice %16 {offsets = [0, 80], sizes = [16, 8], strides = [1, 1]} : vector<16x96xf32> to vector<16x8xf32>
    %cst_24 = arith.constant dense<0.000000e+00> : vector<16x16xf32>
    %50 = tpu.matmul %47, %48, %cst_24 {dimension_numbers = #tpu.dot_dimension_numbers<[1], [1], [0], [0], [0, 0, 1, 0], [], []>} : vector<16x8xf32>, vector<16x8xf32>, vector<16x16xf32> -> vector<16x16xf32>
    %51 = arith.addf %50, %1 : vector<16x16xf32>
    %cst_25 = arith.constant dense<0xFF800000> : vector<16xf32>
    %52 = vector.multi_reduction <maximumf>, %51, %cst_25 [1] : vector<16x16xf32> to vector<16xf32>
    %53 = vector.shape_cast %52 : vector<16xf32> to vector<16x1xf32>
    %54 = vector.broadcast %53 : vector<16x1xf32> to vector<16x16xf32>
    %55 = arith.subf %51, %54 : vector<16x16xf32>
    %56 = math.exp %55 : vector<16x16xf32>
    %cst_26 = arith.constant dense<0.000000e+00> : vector<16xf32>
    %57 = vector.multi_reduction <add>, %56, %cst_26 [1] : vector<16x16xf32> to vector<16xf32>
    %58 = vector.shape_cast %57 : vector<16xf32> to vector<16x1xf32>
    %59 = vector.broadcast %58 : vector<16x1xf32> to vector<16x16xf32>
    %60 = arith.divf %56, %59 : vector<16x16xf32>
    %cst_27 = arith.constant dense<0.000000e+00> : vector<16x8xf32>
    %61 = tpu.matmul %60, %49, %cst_27 {dimension_numbers = #tpu.dot_dimension_numbers<[1], [0], [0], [1], [0, 0, 1, 1], [], []>} : vector<16x16xf32>, vector<16x8xf32>, vector<16x8xf32> -> vector<16x8xf32>
    %62 = vector.extract_strided_slice %16 {offsets = [0, 24], sizes = [16, 8], strides = [1, 1]} : vector<16x96xf32> to vector<16x8xf32>
    %63 = vector.extract_strided_slice %16 {offsets = [0, 56], sizes = [16, 8], strides = [1, 1]} : vector<16x96xf32> to vector<16x8xf32>
    %64 = vector.extract_strided_slice %16 {offsets = [0, 88], sizes = [16, 8], strides = [1, 1]} : vector<16x96xf32> to vector<16x8xf32>
    %cst_28 = arith.constant dense<0.000000e+00> : vector<16x16xf32>
    %65 = tpu.matmul %62, %63, %cst_28 {dimension_numbers = #tpu.dot_dimension_numbers<[1], [1], [0], [0], [0, 0, 1, 0], [], []>} : vector<16x8xf32>, vector<16x8xf32>, vector<16x16xf32> -> vector<16x16xf32>
    %66 = arith.addf %65, %1 : vector<16x16xf32>
    %cst_29 = arith.constant dense<0xFF800000> : vector<16xf32>
    %67 = vector.multi_reduction <maximumf>, %66, %cst_29 [1] : vector<16x16xf32> to vector<16xf32>
    %68 = vector.shape_cast %67 : vector<16xf32> to vector<16x1xf32>
    %69 = vector.broadcast %68 : vector<16x1xf32> to vector<16x16xf32>
    %70 = arith.subf %66, %69 : vector<16x16xf32>
    %71 = math.exp %70 : vector<16x16xf32>
    %cst_30 = arith.constant dense<0.000000e+00> : vector<16xf32>
    %72 = vector.multi_reduction <add>, %71, %cst_30 [1] : vector<16x16xf32> to vector<16xf32>
    %73 = vector.shape_cast %72 : vector<16xf32> to vector<16x1xf32>
    %74 = vector.broadcast %73 : vector<16x1xf32> to vector<16x16xf32>
    %75 = arith.divf %71, %74 : vector<16x16xf32>
    %cst_31 = arith.constant dense<0.000000e+00> : vector<16x8xf32>
    %76 = tpu.matmul %75, %64, %cst_31 {dimension_numbers = #tpu.dot_dimension_numbers<[1], [0], [0], [1], [0, 0, 1, 1], [], []>} : vector<16x16xf32>, vector<16x8xf32>, vector<16x8xf32> -> vector<16x8xf32>
    %77 = tpu.concatenate %31, %46, %61, %76 in 1 : vector<16x8xf32>, vector<16x8xf32>, vector<16x8xf32>, vector<16x8xf32> -> vector<16x32xf32>
    %cst_32 = arith.constant dense<0.000000e+00> : vector<16x32xf32>
    %78 = tpu.matmul %77, %5, %cst_32 {dimension_numbers = #tpu.dot_dimension_numbers<[1], [0], [0], [1], [0, 0, 1, 1], [], []>} : vector<16x32xf32>, vector<32x32xf32>, vector<16x32xf32> -> vector<16x32xf32>
    %79 = vector.broadcast %7 : vector<1x32xf32> to vector<16x32xf32>
    %80 = arith.addf %78, %79 : vector<16x32xf32>
    %81 = arith.addf %80, %0 : vector<16x32xf32>
    %cst_33 = arith.constant dense<0.000000e+00> : vector<16xf32>
    %82 = vector.multi_reduction <add>, %81, %cst_33 [1] : vector<16x32xf32> to vector<16xf32>
    %83 = vector.shape_cast %82 : vector<16xf32> to vector<16x1xf32>
    %cst_34 = arith.constant 3.200000e+01 : f32
    %84 = vector.broadcast %cst_34 : f32 to vector<16x1xf32>
    %85 = arith.divf %83, %84 : vector<16x1xf32>
    %86 = vector.broadcast %85 : vector<16x1xf32> to vector<16x32xf32>
    %87 = arith.subf %81, %86 : vector<16x32xf32>
    %88 = arith.mulf %87, %87 : vector<16x32xf32>
    %cst_35 = arith.constant dense<0.000000e+00> : vector<16xf32>
    %89 = vector.multi_reduction <add>, %88, %cst_35 [1] : vector<16x32xf32> to vector<16xf32>
    %90 = vector.shape_cast %89 : vector<16xf32> to vector<16x1xf32>
    %cst_36 = arith.constant 3.200000e+01 : f32
    %91 = vector.broadcast %cst_36 : f32 to vector<16x1xf32>
    %92 = arith.divf %90, %91 : vector<16x1xf32>
    %93 = vector.broadcast %85 : vector<16x1xf32> to vector<16x32xf32>
    %94 = arith.subf %81, %93 : vector<16x32xf32>
    %cst_37 = arith.constant 9.99999974E-6 : f32
    %95 = vector.broadcast %cst_37 : f32 to vector<16x1xf32>
    %96 = arith.addf %92, %95 : vector<16x1xf32>
    %97 = math.rsqrt %96 : vector<16x1xf32>
    %98 = vector.broadcast %97 : vector<16x1xf32> to vector<16x32xf32>
    %99 = arith.mulf %94, %98 : vector<16x32xf32>
    %100 = vector.broadcast %10 : vector<1x32xf32> to vector<16x32xf32>
    %101 = arith.mulf %99, %100 : vector<16x32xf32>
    %102 = vector.broadcast %11 : vector<1x32xf32> to vector<16x32xf32>
    %103 = arith.addf %101, %102 : vector<16x32xf32>
    %cst_38 = arith.constant dense<0.000000e+00> : vector<16x64xf32>
    %104 = tpu.matmul %103, %3, %cst_38 {dimension_numbers = #tpu.dot_dimension_numbers<[1], [0], [0], [1], [0, 0, 1, 1], [], []>} : vector<16x32xf32>, vector<32x64xf32>, vector<16x64xf32> -> vector<16x64xf32>
    %105 = vector.broadcast %8 : vector<1x64xf32> to vector<16x64xf32>
    %106 = arith.addf %104, %105 : vector<16x64xf32>
    %cst_39 = arith.constant 0.000000e+00 : f32
    %107 = vector.broadcast %cst_39 : f32 to vector<16x64xf32>
    %108 = arith.maximumf %106, %107 : vector<16x64xf32>
    %cst_40 = arith.constant dense<0.000000e+00> : vector<16x32xf32>
    %109 = tpu.matmul %108, %4, %cst_40 {dimension_numbers = #tpu.dot_dimension_numbers<[1], [0], [0], [1], [0, 0, 1, 1], [], []>} : vector<16x64xf32>, vector<64x32xf32>, vector<16x32xf32> -> vector<16x32xf32>
    %110 = vector.broadcast %9 : vector<1x32xf32> to vector<16x32xf32>
    %111 = arith.addf %109, %110 : vector<16x32xf32>
    %112 = arith.addf %111, %103 : vector<16x32xf32>
    %cst_41 = arith.constant dense<0.000000e+00> : vector<16xf32>
    %113 = vector.multi_reduction <add>, %112, %cst_41 [1] : vector<16x32xf32> to vector<16xf32>
    %114 = vector.shape_cast %113 : vector<16xf32> to vector<16x1xf32>
    %cst_42 = arith.constant 3.200000e+01 : f32
    %115 = vector.broadcast %cst_42 : f32 to vector<16x1xf32>
    %116 = arith.divf %114, %115 : vector<16x1xf32>
    %117 = vector.broadcast %116 : vector<16x1xf32> to vector<16x32xf32>
    %118 = arith.subf %112, %117 : vector<16x32xf32>
    %119 = arith.mulf %118, %118 : vector<16x32xf32>
    %cst_43 = arith.constant dense<0.000000e+00> : vector<16xf32>
    %120 = vector.multi_reduction <add>, %119, %cst_43 [1] : vector<16x32xf32> to vector<16xf32>
    %121 = vector.shape_cast %120 : vector<16xf32> to vector<16x1xf32>
    %cst_44 = arith.constant 3.200000e+01 : f32
    %122 = vector.broadcast %cst_44 : f32 to vector<16x1xf32>
    %123 = arith.divf %121, %122 : vector<16x1xf32>
    %124 = vector.broadcast %116 : vector<16x1xf32> to vector<16x32xf32>
    %125 = arith.subf %112, %124 : vector<16x32xf32>
    %cst_45 = arith.constant 9.99999974E-6 : f32
    %126 = vector.broadcast %cst_45 : f32 to vector<16x1xf32>
    %127 = arith.addf %123, %126 : vector<16x1xf32>
    %128 = math.rsqrt %127 : vector<16x1xf32>
    %129 = vector.broadcast %128 : vector<16x1xf32> to vector<16x32xf32>
    %130 = arith.mulf %125, %129 : vector<16x32xf32>
    %131 = vector.broadcast %12 : vector<1x32xf32> to vector<16x32xf32>
    %132 = arith.mulf %130, %131 : vector<16x32xf32>
    %133 = vector.broadcast %13 : vector<1x32xf32> to vector<16x32xf32>
    %134 = arith.addf %132, %133 : vector<16x32xf32>
    %c0_46 = arith.constant 0 : index
    %c0_47 = arith.constant 0 : index
    %135 = vector.load %arg3[%c0_46, %c0_47] : memref<16x32xf32, #tpu.memory_space<vmem>>, vector<16x32xf32>
    tpu.vector_store %arg3[%c0_46, %c0_47], %134 {strides = array<i32>} : memref<16x32xf32, #tpu.memory_space<vmem>>, vector<16x32xf32>,
    return
  }
}

</mosaic_0001>

<llo_original>
// kernel: transformer_encoder_layer.1
$region0: #{transformer_encoder_layer.1}
  #allocation0 [shape = 'u32[]', space=smem, size = 0x4, offset = 0x4, fixed_abs, tag = 'smem constant byte address 0x4 - core index']
  #allocation1 [shape = 'u32[144,128]{1,0:T(1,128)}', space=vmem, size = 0x12000, scoped, tag = 'internal scratch']
  %s0 = inlined_call_operand.vmem [shape: f32[16,32], index: 0, kind: input, shape index: {}, may-alias: {0,3}]
  %s1 = inlined_call_operand.vmem [shape: f32[16,16], index: 1, kind: input, shape index: {}]
  %s2 = inlined_call_operand.hbm [shape: f32[168,128], index: 2, kind: input, shape index: {}]
  %s3 = inlined_call_operand.vmem [shape: f32[16,32], index: 3, kind: output, shape index: {}, may-alias: {0,3}]
  %s4 = sld [smem:[#allocation0]]
  $region26: #{transformer_encoder_layer.1} parent=0
    _
  %s6 = ssub.s32 1, %s4
  %s7 = scalar_select 0, %s6, %s4
  $region1: #{transformer_encoder_layer.1} parent=0
    #allocation2 [shape = 'u8[86016]{0}', space=vmem, size = 0x15000, scoped, tag = 'input window, operand 2, single buffered']
    #allocation3 [shape = 's32[1]{0}', space=sflag, size = 0x4, scoped, tag = 'scoped memory for transformer_encoder_layer.1']
    %8 = vsyncpa [#allocation3], 0
    // Predicated region
    $region2: #{transformer_encoder_layer.1} parent=1 // pred_check
      _
    $region3: #{transformer_encoder_layer.1} parent=1 // pred_check_branch
      %10 = sbr.rel (0) target = $region5
    $region4: #{transformer_encoder_layer.1} parent=1 // pred_region
      _
    $region5: #{transformer_encoder_layer.1} parent=1 // pred_fallthru
      _
    // Predicated region
    $region6: #{transformer_encoder_layer.1} parent=1 // pred_check
      _
    $region7: #{transformer_encoder_layer.1} parent=1 // pred_check_branch
      %12 = sbr.rel (0) target = $region9
    $region8: #{transformer_encoder_layer.1} parent=1 // pred_region
      _
    $region9: #{transformer_encoder_layer.1} parent=1 // pred_fallthru
      _
    // Predicated region
    $region10: #{transformer_encoder_layer.1} parent=1 // pred_check
      _
    $region11: #{transformer_encoder_layer.1} parent=1 // pred_check_branch
      %14 = sbr.rel (0) target = $region13
    $region12: #{transformer_encoder_layer.1} parent=1 // pred_region
      %s16 = ssub.s32 2688, 2688
      %17 = vsyncadd [#allocation3], %s16
      %s18 = sshll.u32 [#allocation2], 4
      %s19 = int_to_ptr.vmem [resolvable:$true] %s18
      %24 = dma.hbm_to_vmem [thread:$0]  %s2, 2688, %s19, [#allocation3], 128, 128, 8
    $region13: #{transformer_encoder_layer.1} parent=1 // pred_fallthru
      _
    // Predicated region
    $region14: #{transformer_encoder_layer.1} parent=1 // pred_check
      _
    $region15: #{transformer_encoder_layer.1} parent=1 // pred_check_branch
      %26 = sbr.rel (0) target = $region17
    $region16: #{transformer_encoder_layer.1} parent=1 // pred_region
      %27 = dma.done [#allocation3], 2688
    $region17: #{transformer_encoder_layer.1} parent=1 // pred_fallthru
      _
    %v28 = vld [vmem:[%s0] sm:$0xff]
    %v29 = vld [vmem:[%s0 + $0x8] sm:$0xff]
    %v30 = vld [vmem:[%s1] sm:$0xff]
    %v31 = vld [vmem:[%s1 + $0x8] sm:$0xff]
    %v32 = vld [vmem:[#allocation2] sm:$0xff]
    %v33 = vld [vmem:[#allocation2 + $0x8] sm:$0xff]
    %v34 = vld [vmem:[#allocation2 + $0x10] sm:$0xff]
    %v35 = vld [vmem:[#allocation2 + $0x18] sm:$0xff]
    %v36 = vld [vmem:[#allocation2 + $0x20] sm:$0xff]
    %v37 = vld [vmem:[#allocation2 + $0x28] sm:$0xff]
    %v38 = vld [vmem:[#allocation2 + $0x30] sm:$0xff]
    %v39 = vld [vmem:[#allocation2 + $0x38] sm:$0xff]
    %v40 = vld [vmem:[#allocation2 + $0x40] sm:$0xff]
    %v41 = vld [vmem:[#allocation2 + $0x48] sm:$0xff]
    %v42 = vld [vmem:[#allocation2 + $0x50] sm:$0xff]
    %v43 = vld [vmem:[#allocation2 + $0x58] sm:$0xff]
    %v44 = vld [vmem:[#allocation2 + $0x60] sm:$0xff]
    %v45 = vld [vmem:[#allocation2 + $0x68] sm:$0xff]
    %v46 = vld [vmem:[#allocation2 + $0x70] sm:$0xff]
    %v47 = vld [vmem:[#allocation2 + $0x78] sm:$0xff]
    %v48 = vld [vmem:[#allocation2 + $0x80] sm:$0xff]
    %v49 = vld [vmem:[#allocation2 + $0x88] sm:$0xff]
    %v50 = vld [vmem:[#allocation2 + $0x90] sm:$0xff]
    %v51 = vld [vmem:[#allocation2 + $0x98] sm:$0xff]
    %v52 = vld [vmem:[#allocation2 + $0xa0] sm:$0x1]
    %v53 = vld [vmem:[#allocation2 + $0xa1] sm:$0x1]
    %v54 = vld [vmem:[#allocation2 + $0xa2] sm:$0x1]
    %v55 = vld [vmem:[#allocation2 + $0xa3] sm:$0x1]
    %v56 = vld [vmem:[#allocation2 + $0xa4] sm:$0x1]
    %v57 = vld [vmem:[#allocation2 + $0xa5] sm:$0x1]
    %v58 = vld [vmem:[#allocation2 + $0xa6] sm:$0x1]
    %v59 = vld [vmem:[#allocation2 + $0xa7] sm:$0x1]
    %v60 = vlaneseq
    %v61 = vshrl.u32 %v60, 7
    %v62 = vsub.s32 0, %v61
    %v63 = vrot.slane %v52, %v62
    %vm64 = vcmask 261120
    %v66 = vsel %vm64, %v28, 0
    %v69 = vsel %vm64, %v29, 0
    %71 = vmatprep.subr.mxu0 0.0
    %72 = vmatpush1.msra.mxu0 0.0
    %73 = vmatprep.subr.mxu0 0.0
    %74 = vmatpush1.msra.mxu0 0.0
    %75 = vmatprep.subr.mxu0 0.0
    %76 = vmatpush1.msra.mxu0 0.0
    %77 = vmatprep.subr.mxu0 0.0
    %78 = vmatpush1.msra.mxu0 0.0
    %79 = vmatprep.subr.mxu0 0.0
    %80 = vmatpush1.msra.mxu0 0.0
    %81 = vmatprep.subr.mxu0 0.0
    %82 = vmatpush1.msra.mxu0 0.0
    %83 = vmatprep.subr.mxu0 0.0
    %84 = vmatpush1.msra.mxu0 0.0
    %85 = vmatprep.subr.mxu0 0.0
    %86 = vmatpush1.msra.mxu0 0.0
    %87 = vmatprep.subr.mxu0 0.0
    %88 = vmatpush1.msra.mxu0 0.0
    %89 = vmatprep.subr.mxu0 0.0
    %90 = vmatpush1.msra.mxu0 0.0
    %91 = vmatprep.subr.mxu0 0.0
    %92 = vmatpush1.msra.mxu0 0.0
    %93 = vmatprep.subr.mxu0 0.0
    %94 = vmatpush1.msra.mxu0 0.0
    %95 = vmatprep.subr.mxu0 0.0
    %96 = vmatpush1.msra.mxu0 %v35
    %97 = vmatprep.subr.mxu0 0.0
    %98 = vmatpush1.msra.mxu0 %v34
    %99 = vmatprep.subr.mxu0 0.0
    %100 = vmatpush1.msra.mxu0 %v33
    %101 = vmatprep.subr.mxu0 0.0
    %102 = vmatpush1.msra.mxu0 %v32
    %103 = vmatprep.subr.mxu0 0.0
    %104 = vmatpush2.msra.mxu0 0.0
    %105 = vmatprep.subr.mxu0 0.0
    %106 = vmatpush2.msra.mxu0 0.0
    %107 = vmatprep.subr.mxu0 0.0
    %108 = vmatpush2.msra.mxu0 0.0
    %109 = vmatprep.subr.mxu0 0.0
    %110 = vmatpush2.msra.mxu0 0.0
    %111 = vmatprep.subr.mxu0 0.0
    %112 = vmatpush2.msra.mxu0 0.0
    %113 = vmatprep.subr.mxu0 0.0
    %114 = vmatpush2.msra.mxu0 0.0
    %115 = vmatprep.subr.mxu0 0.0
    %116 = vmatpush2.msra.mxu0 0.0
    %117 = vmatprep.subr.mxu0 0.0
    %118 = vmatpush2.msra.mxu0 0.0
    %119 = vmatprep.subr.mxu0 0.0
    %120 = vmatpush2.msra.mxu0 0.0
    %121 = vmatprep.subr.mxu0 0.0
    %122 = vmatpush2.msra.mxu0 0.0
    %123 = vmatprep.subr.mxu0 0.0
    %124 = vmatpush2.msra.mxu0 0.0
    %125 = vmatprep.subr.mxu0 0.0
    %126 = vmatpush2.msra.mxu0 0.0
    %127 = vmatprep.subr.mxu0 0.0
    %128 = vmatpush2.msra.mxu0 0.0
    %129 = vmatprep.subr.mxu0 0.0
    %130 = vmatpush2.msra.mxu0 0.0
    %131 = vmatprep.subr.mxu0 0.0
    %132 = vmatpush2.msra.mxu0 0.0
    %133 = vmatprep.subr.mxu0 0.0
    %134 = vmatpush2.msra.mxu0 0.0
    %135 = vmatprep.mubr.f32.mxu0 0.0
    %136 = vmatmul.mubr.f32.gmra.mxu0 %v66
    %v137 = vpop.f32.mrf.mxu0
    %v138 = vadd.f32 %v63, %v137
    %v139 = vpop.f32.mrf.mxu0
    %140 = vmatprep.mubr.f32.mxu0 0.0
    %141 = vmatmul.mubr.f32.gmra.mxu0 %v69
    %v142 = vpop.f32.mrf.mxu0
    %v143 = vadd.f32 %v63, %v142
    %v144 = vpop.f32.mrf.mxu0
    %145 = vdwg.mxu0
    %148 = vrot.lane.b32.xlu0 %v138, 96
    %v149 = vpop.permute.xlu0 %148
    %150 = vrot.lane.b32.xlu0 %v143, 96
    %v151 = vpop.permute.xlu0 %150
    %vm152 = vcmask 64512
    %v153 = vsel %vm152, %v138, 0
    %v155 = vsel %vm152, %v143, 0
    %v157 = vsel %vm152, %v149, 0
    %v159 = vsel %vm152, %v151, 0
    %161 = vmatprep.subr.mxu0 0.0
    %162 = vmatpush1.xpose.msra.mxu0 0.0
    %163 = vmatprep.subr.mxu0 0.0
    %164 = vmatpush1.xpose.msra.mxu0 0.0
    %165 = vmatprep.subr.mxu0 0.0
    %166 = vmatpush1.xpose.msra.mxu0 0.0
    %167 = vmatprep.subr.mxu0 0.0
    %168 = vmatpush1.xpose.msra.mxu0 0.0
    %169 = vmatprep.subr.mxu0 0.0
    %170 = vmatpush1.xpose.msra.mxu0 0.0
    %171 = vmatprep.subr.mxu0 0.0
    %172 = vmatpush1.xpose.msra.mxu0 0.0
    %173 = vmatprep.subr.mxu0 0.0
    %174 = vmatpush1.xpose.msra.mxu0 0.0
    %175 = vmatprep.subr.mxu0 0.0
    %176 = vmatpush1.xpose.msra.mxu0 0.0
    %177 = vmatprep.subr.mxu0 0.0
    %178 = vmatpush1.xpose.msra.mxu0 0.0
    %179 = vmatprep.subr.mxu0 0.0
    %180 = vmatpush1.xpose.msra.mxu0 0.0
    %181 = vmatprep.subr.mxu0 0.0
    %182 = vmatpush1.xpose.msra.mxu0 0.0
    %183 = vmatprep.subr.mxu0 0.0
    %184 = vmatpush1.xpose.msra.mxu0 0.0
    %185 = vmatprep.subr.mxu0 0.0
    %186 = vmatpush1.xpose.msra.mxu0 0.0
    %187 = vmatprep.subr.mxu0 0.0
    %188 = vmatpush1.xpose.msra.mxu0 0.0
    %189 = vmatprep.subr.mxu0 0.0
    %190 = vmatpush1.xpose.msra.mxu0 %v159
    %191 = vmatprep.subr.mxu0 0.0
    %192 = vmatpush1.xpose.msra.mxu0 %v157
    %193 = vmatprep.subr.mxu0 0.0
    %194 = vmatpush2.xpose.msra.mxu0 0.0
    %195 = vmatprep.subr.mxu0 0.0
    %196 = vmatpush2.xpose.msra.mxu0 0.0
    %197 = vmatprep.subr.mxu0 0.0
    %198 = vmatpush2.xpose.msra.mxu0 0.0
    %199 = vmatprep.subr.mxu0 0.0
    %200 = vmatpush2.xpose.msra.mxu0 0.0
    %201 = vmatprep.subr.mxu0 0.0
    %202 = vmatpush2.xpose.msra.mxu0 0.0
    %203 = vmatprep.subr.mxu0 0.0
    %204 = vmatpush2.xpose.msra.mxu0 0.0
    %205 = vmatprep.subr.mxu0 0.0
    %206 = vmatpush2.xpose.msra.mxu0 0.0
    %207 = vmatprep.subr.mxu0 0.0
    %208 = vmatpush2.xpose.msra.mxu0 0.0
    %209 = vmatprep.subr.mxu0 0.0
    %210 = vmatpush2.xpose.msra.mxu0 0.0
    %211 = vmatprep.subr.mxu0 0.0
    %212 = vmatpush2.xpose.msra.mxu0 0.0
    %213 = vmatprep.subr.mxu0 0.0
    %214 = vmatpush2.xpose.msra.mxu0 0.0
    %215 = vmatprep.subr.mxu0 0.0
    %216 = vmatpush2.xpose.msra.mxu0 0.0
    %217 = vmatprep.subr.mxu0 0.0
    %218 = vmatpush2.xpose.msra.mxu0 0.0
    %219 = vmatprep.subr.mxu0 0.0
    %220 = vmatpush2.xpose.msra.mxu0 0.0
    %221 = vmatprep.subr.mxu0 0.0
    %222 = vmatpush2.xpose.msra.mxu0 0.0
    %223 = vmatprep.subr.mxu0 0.0
    %224 = vmatpush2.xpose.msra.mxu0 0.0
    %225 = vmatprep.mubr.f32.mxu0 0.0
    %226 = vmatmul.mubr.f32.gmra.mxu0 %v153
    %v227 = vpop.f32.mrf.mxu0
    %v228 = vadd.f32 %v30, %v227
    %v229 = vpop.f32.mrf.mxu0
    %230 = vmatprep.mubr.f32.mxu0 0.0
    %231 = vmatmul.mubr.f32.gmra.mxu0 %v155
    %v232 = vpop.f32.mrf.mxu0
    %v233 = vadd.f32 %v31, %v232
    %v234 = vpop.f32.mrf.mxu0
    %235 = vdwg.mxu0
    %vm236 = vcmask 130048
    %v237 = vsel %vm236, %v228, -inf
    %238 = vmax.xlane.f32.xlu0 %v237
    %v239 = vpop.xlane.xlu0 %238
    %v240 = vsel %vm236, %v233, -inf
    %241 = vmax.xlane.f32.xlu0 %v240
    %v242 = vpop.xlane.xlu0 %241
    %v243 = vsub.f32 %v228, %v239
    %v244 = vsub.f32 %v233, %v242
    %v245 = vmul.f32 %v243, 1.442695
    %v246 = vpow.pop %v245
    %v247 = vmul.f32 %v244, 1.442695
    %v248 = vpow.pop %v247
    %v249 = vsel %vm236, %v246, 0.0
    %250 = vadd.xlane.f32.xlu0 %v249
    %v251 = vpop.xlane.xlu0 %250
    %v252 = vsel %vm236, %v248, 0.0
    %253 = vadd.xlane.f32.xlu0 %v252
    %v254 = vpop.xlane.xlu0 %253
    %v255 = vrcp.pop %v251
    %v256 = vmul.f32 %v246, %v255
    %v257 = vrcp.pop %v254
    %v258 = vmul.f32 %v248, %v257
    %259 = vrot.lane.b32.xlu0 %v138, 64
    %v260 = vpop.permute.xlu0 %259
    %261 = vrot.lane.b32.xlu0 %v143, 64
    %v262 = vpop.permute.xlu0 %261
    %v266 = vsel %vm236, %v256, 0
    %v269 = vsel %vm236, %v258, 0
    %271 = vmatprep.subr.mxu0 0.0
    %272 = vmatpush1.msra.mxu0 0.0
    %273 = vmatprep.subr.mxu0 0.0
    %274 = vmatpush1.msra.mxu0 0.0
    %275 = vmatprep.subr.mxu0 0.0
    %276 = vmatpush1.msra.mxu0 0.0
    %277 = vmatprep.subr.mxu0 0.0
    %278 = vmatpush1.msra.mxu0 0.0
    %279 = vmatprep.subr.mxu0 0.0
    %280 = vmatpush1.msra.mxu0 0.0
    %281 = vmatprep.subr.mxu0 0.0
    %282 = vmatpush1.msra.mxu0 0.0
    %283 = vmatprep.subr.mxu0 0.0
    %284 = vmatpush1.msra.mxu0 0.0
    %285 = vmatprep.subr.mxu0 0.0
    %286 = vmatpush1.msra.mxu0 0.0
    %287 = vmatprep.subr.mxu0 0.0
    %288 = vmatpush1.msra.mxu0 0.0
    %289 = vmatprep.subr.mxu0 0.0
    %290 = vmatpush1.msra.mxu0 0.0
    %291 = vmatprep.subr.mxu0 0.0
    %292 = vmatpush1.msra.mxu0 0.0
    %293 = vmatprep.subr.mxu0 0.0
    %294 = vmatpush1.msra.mxu0 0.0
    %295 = vmatprep.subr.mxu0 0.0
    %296 = vmatpush1.msra.mxu0 0.0
    %297 = vmatprep.subr.mxu0 0.0
    %298 = vmatpush1.msra.mxu0 0.0
    %299 = vmatprep.subr.mxu0 0.0
    %300 = vmatpush1.msra.mxu0 %v262
    %301 = vmatprep.subr.mxu0 0.0
    %302 = vmatpush1.msra.mxu0 %v260
    %303 = vmatprep.subr.mxu0 0.0
    %304 = vmatpush2.msra.mxu0 0.0
    %305 = vmatprep.subr.mxu0 0.0
    %306 = vmatpush2.msra.mxu0 0.0
    %307 = vmatprep.subr.mxu0 0.0
    %308 = vmatpush2.msra.mxu0 0.0
    %309 = vmatprep.subr.mxu0 0.0
    %310 = vmatpush2.msra.mxu0 0.0
    %311 = vmatprep.subr.mxu0 0.0
    %312 = vmatpush2.msra.mxu0 0.0
    %313 = vmatprep.subr.mxu0 0.0
    %314 = vmatpush2.msra.mxu0 0.0
    %315 = vmatprep.subr.mxu0 0.0
    %316 = vmatpush2.msra.mxu0 0.0
    %317 = vmatprep.subr.mxu0 0.0
    %318 = vmatpush2.msra.mxu0 0.0
    %319 = vmatprep.subr.mxu0 0.0
    %320 = vmatpush2.msra.mxu0 0.0
    %321 = vmatprep.subr.mxu0 0.0
    %322 = vmatpush2.msra.mxu0 0.0
    %323 = vmatprep.subr.mxu0 0.0
    %324 = vmatpush2.msra.mxu0 0.0
    %325 = vmatprep.subr.mxu0 0.0
    %326 = vmatpush2.msra.mxu0 0.0
    %327 = vmatprep.subr.mxu0 0.0
    %328 = vmatpush2.msra.mxu0 0.0
    %329 = vmatprep.subr.mxu0 0.0
    %330 = vmatpush2.msra.mxu0 0.0
    %331 = vmatprep.subr.mxu0 0.0
    %332 = vmatpush2.msra.mxu0 0.0
    %333 = vmatprep.subr.mxu0 0.0
    %334 = vmatpush2.msra.mxu0 0.0
    %335 = vmatprep.mubr.f32.mxu0 0.0
    %336 = vmatmul.mubr.f32.gmra.mxu0 %v266
    %v337 = vpop.f32.mrf.mxu0
    %v338 = vadd.f32 0.0, %v337
    %v339 = vpop.f32.mrf.mxu0
    %340 = vmatprep.mubr.f32.mxu0 0.0
    %341 = vmatmul.mubr.f32.gmra.mxu0 %v269
    %v342 = vpop.f32.mrf.mxu0
    %v343 = vadd.f32 0.0, %v342
    %v344 = vpop.f32.mrf.mxu0
    %345 = vdwg.mxu0
    %346 = vrot.lane.b32.xlu0 %v138, 120
    %v347 = vpop.permute.xlu0 %346
    %348 = vrot.lane.b32.xlu0 %v143, 120
    %v349 = vpop.permute.xlu0 %348
    %350 = vrot.lane.b32.xlu0 %v138, 88
    %v351 = vpop.permute.xlu0 %350
    %352 = vrot.lane.b32.xlu0 %v143, 88
    %v353 = vpop.permute.xlu0 %352
    %v354 = vsel %vm152, %v347, 0
    %v356 = vsel %vm152, %v349, 0
    %v358 = vsel %vm152, %v351, 0
    %v360 = vsel %vm152, %v353, 0
    %362 = vmatprep.subr.mxu0 0.0
    %363 = vmatpush1.xpose.msra.mxu0 0.0
    %364 = vmatprep.subr.mxu0 0.0
    %365 = vmatpush1.xpose.msra.mxu0 0.0
    %366 = vmatprep.subr.mxu0 0.0
    %367 = vmatpush1.xpose.msra.mxu0 0.0
    %368 = vmatprep.subr.mxu0 0.0
    %369 = vmatpush1.xpose.msra.mxu0 0.0
    %370 = vmatprep.subr.mxu0 0.0
    %371 = vmatpush1.xpose.msra.mxu0 0.0
    %372 = vmatprep.subr.mxu0 0.0
    %373 = vmatpush1.xpose.msra.mxu0 0.0
    %374 = vmatprep.subr.mxu0 0.0
    %375 = vmatpush1.xpose.msra.mxu0 0.0
    %376 = vmatprep.subr.mxu0 0.0
    %377 = vmatpush1.xpose.msra.mxu0 0.0
    %378 = vmatprep.subr.mxu0 0.0
    %379 = vmatpush1.xpose.msra.mxu0 0.0
    %380 = vmatprep.subr.mxu0 0.0
    %381 = vmatpush1.xpose.msra.mxu0 0.0
    %382 = vmatprep.subr.mxu0 0.0
    %383 = vmatpush1.xpose.msra.mxu0 0.0
    %384 = vmatprep.subr.mxu0 0.0
    %385 = vmatpush1.xpose.msra.mxu0 0.0
    %386 = vmatprep.subr.mxu0 0.0
    %387 = vmatpush1.xpose.msra.mxu0 0.0
    %388 = vmatprep.subr.mxu0 0.0
    %389 = vmatpush1.xpose.msra.mxu0 0.0
    %390 = vmatprep.subr.mxu0 0.0
    %391 = vmatpush1.xpose.msra.mxu0 %v360
    %392 = vmatprep.subr.mxu0 0.0
    %393 = vmatpush1.xpose.msra.mxu0 %v358
    %394 = vmatprep.subr.mxu0 0.0
    %395 = vmatpush2.xpose.msra.mxu0 0.0
    %396 = vmatprep.subr.mxu0 0.0
    %397 = vmatpush2.xpose.msra.mxu0 0.0
    %398 = vmatprep.subr.mxu0 0.0
    %399 = vmatpush2.xpose.msra.mxu0 0.0
    %400 = vmatprep.subr.mxu0 0.0
    %401 = vmatpush2.xpose.msra.mxu0 0.0
    %402 = vmatprep.subr.mxu0 0.0
    %403 = vmatpush2.xpose.msra.mxu0 0.0
    %404 = vmatprep.subr.mxu0 0.0
    %405 = vmatpush2.xpose.msra.mxu0 0.0
    %406 = vmatprep.subr.mxu0 0.0
    %407 = vmatpush2.xpose.msra.mxu0 0.0
    %408 = vmatprep.subr.mxu0 0.0
    %409 = vmatpush2.xpose.msra.mxu0 0.0
    %410 = vmatprep.subr.mxu0 0.0
    %411 = vmatpush2.xpose.msra.mxu0 0.0
    %412 = vmatprep.subr.mxu0 0.0
    %413 = vmatpush2.xpose.msra.mxu0 0.0
    %414 = vmatprep.subr.mxu0 0.0
    %415 = vmatpush2.xpose.msra.mxu0 0.0
    %416 = vmatprep.subr.mxu0 0.0
    %417 = vmatpush2.xpose.msra.mxu0 0.0
    %418 = vmatprep.subr.mxu0 0.0
    %419 = vmatpush2.xpose.msra.mxu0 0.0
    %420 = vmatprep.subr.mxu0 0.0
    %421 = vmatpush2.xpose.msra.mxu0 0.0
    %422 = vmatprep.subr.mxu0 0.0
    %423 = vmatpush2.xpose.msra.mxu0 0.0
    %424 = vmatprep.subr.mxu0 0.0
    %425 = vmatpush2.xpose.msra.mxu0 0.0
    %426 = vmatprep.mubr.f32.mxu0 0.0
    %427 = vmatmul.mubr.f32.gmra.mxu0 %v354
    %v428 = vpop.f32.mrf.mxu0
    %v429 = vadd.f32 %v30, %v428
    %v430 = vpop.f32.mrf.mxu0
    %431 = vmatprep.mubr.f32.mxu0 0.0
    %432 = vmatmul.mubr.f32.gmra.mxu0 %v356
    %v433 = vpop.f32.mrf.mxu0
    %v434 = vadd.f32 %v31, %v433
    %v435 = vpop.f32.mrf.mxu0
    %436 = vdwg.mxu0
    %v437 = vsel %vm236, %v429, -inf
    %438 = vmax.xlane.f32.xlu0 %v437
    %v439 = vpop.xlane.xlu0 %438
    %v440 = vsel %vm236, %v434, -inf
    %441 = vmax.xlane.f32.xlu0 %v440
    %v442 = vpop.xlane.xlu0 %441
    %v443 = vsub.f32 %v429, %v439
    %v444 = vsub.f32 %v434, %v442
    %v445 = vmul.f32 %v443, 1.442695
    %v446 = vpow.pop %v445
    %v447 = vmul.f32 %v444, 1.442695
    %v448 = vpow.pop %v447
    %v449 = vsel %vm236, %v446, 0.0
    %450 = vadd.xlane.f32.xlu0 %v449
    %v451 = vpop.xlane.xlu0 %450
    %v452 = vsel %vm236, %v448, 0.0
    %453 = vadd.xlane.f32.xlu0 %v452
    %v454 = vpop.xlane.xlu0 %453
    %v455 = vrcp.pop %v451
    %v456 = vmul.f32 %v446, %v455
    %v457 = vrcp.pop %v454
    %v458 = vmul.f32 %v448, %v457
    %459 = vrot.lane.b32.xlu0 %v138, 56
    %v460 = vpop.permute.xlu0 %459
    %461 = vrot.lane.b32.xlu0 %v143, 56
    %v462 = vpop.permute.xlu0 %461
    %v466 = vsel %vm236, %v456, 0
    %v469 = vsel %vm236, %v458, 0
    %471 = vmatprep.subr.mxu0 0.0
    %472 = vmatpush1.msra.mxu0 0.0
    %473 = vmatprep.subr.mxu0 0.0
    %474 = vmatpush1.msra.mxu0 0.0
    %475 = vmatprep.subr.mxu0 0.0
    %476 = vmatpush1.msra.mxu0 0.0
    %477 = vmatprep.subr.mxu0 0.0
    %478 = vmatpush1.msra.mxu0 0.0
    %479 = vmatprep.subr.mxu0 0.0
    %480 = vmatpush1.msra.mxu0 0.0
    %481 = vmatprep.subr.mxu0 0.0
    %482 = vmatpush1.msra.mxu0 0.0
    %483 = vmatprep.subr.mxu0 0.0
    %484 = vmatpush1.msra.mxu0 0.0
    %485 = vmatprep.subr.mxu0 0.0
    %486 = vmatpush1.msra.mxu0 0.0
    %487 = vmatprep.subr.mxu0 0.0
    %488 = vmatpush1.msra.mxu0 0.0
    %489 = vmatprep.subr.mxu0 0.0
    %490 = vmatpush1.msra.mxu0 0.0
    %491 = vmatprep.subr.mxu0 0.0
    %492 = vmatpush1.msra.mxu0 0.0
    %493 = vmatprep.subr.mxu0 0.0
    %494 = vmatpush1.msra.mxu0 0.0
    %495 = vmatprep.subr.mxu0 0.0
    %496 = vmatpush1.msra.mxu0 0.0
    %497 = vmatprep.subr.mxu0 0.0
    %498 = vmatpush1.msra.mxu0 0.0
    %499 = vmatprep.subr.mxu0 0.0
    %500 = vmatpush1.msra.mxu0 %v462
    %501 = vmatprep.subr.mxu0 0.0
    %502 = vmatpush1.msra.mxu0 %v460
    %503 = vmatprep.subr.mxu0 0.0
    %504 = vmatpush2.msra.mxu0 0.0
    %505 = vmatprep.subr.mxu0 0.0
    %506 = vmatpush2.msra.mxu0 0.0
    %507 = vmatprep.subr.mxu0 0.0
    %508 = vmatpush2.msra.mxu0 0.0
    %509 = vmatprep.subr.mxu0 0.0
    %510 = vmatpush2.msra.mxu0 0.0
    %511 = vmatprep.subr.mxu0 0.0
    %512 = vmatpush2.msra.mxu0 0.0
    %513 = vmatprep.subr.mxu0 0.0
    %514 = vmatpush2.msra.mxu0 0.0
    %515 = vmatprep.subr.mxu0 0.0
    %516 = vmatpush2.msra.mxu0 0.0
    %517 = vmatprep.subr.mxu0 0.0
    %518 = vmatpush2.msra.mxu0 0.0
    %519 = vmatprep.subr.mxu0 0.0
    %520 = vmatpush2.msra.mxu0 0.0
    %521 = vmatprep.subr.mxu0 0.0
    %522 = vmatpush2.msra.mxu0 0.0
    %523 = vmatprep.subr.mxu0 0.0
    %524 = vmatpush2.msra.mxu0 0.0
    %525 = vmatprep.subr.mxu0 0.0
    %526 = vmatpush2.msra.mxu0 0.0
    %527 = vmatprep.subr.mxu0 0.0
    %528 = vmatpush2.msra.mxu0 0.0
    %529 = vmatprep.subr.mxu0 0.0
    %530 = vmatpush2.msra.mxu0 0.0
    %531 = vmatprep.subr.mxu0 0.0
    %532 = vmatpush2.msra.mxu0 0.0
    %533 = vmatprep.subr.mxu0 0.0
    %534 = vmatpush2.msra.mxu0 0.0
    %535 = vmatprep.mubr.f32.mxu0 0.0
    %536 = vmatmul.mubr.f32.gmra.mxu0 %v466
    %v537 = vpop.f32.mrf.mxu0
    %v538 = vadd.f32 0.0, %v537
    %v539 = vpop.f32.mrf.mxu0
    %540 = vmatprep.mubr.f32.mxu0 0.0
    %541 = vmatmul.mubr.f32.gmra.mxu0 %v469
    %v542 = vpop.f32.mrf.mxu0
    %v543 = vadd.f32 0.0, %v542
    %v544 = vpop.f32.mrf.mxu0
    %545 = vdwg.mxu0
    %546 = vrot.lane.b32.xlu0 %v138, 112
    %v547 = vpop.permute.xlu0 %546
    %548 = vrot.lane.b32.xlu0 %v143, 112
    %v549 = vpop.permute.xlu0 %548
    %550 = vrot.lane.b32.xlu0 %v138, 80
    %v551 = vpop.permute.xlu0 %550
    %552 = vrot.lane.b32.xlu0 %v143, 80
    %v553 = vpop.permute.xlu0 %552
    %v554 = vsel %vm152, %v547, 0
    %v556 = vsel %vm152, %v549, 0
    %v558 = vsel %vm152, %v551, 0
    %v560 = vsel %vm152, %v553, 0
    %562 = vmatprep.subr.mxu0 0.0
    %563 = vmatpush1.xpose.msra.mxu0 0.0
    %564 = vmatprep.subr.mxu0 0.0
    %565 = vmatpush1.xpose.msra.mxu0 0.0
    %566 = vmatprep.subr.mxu0 0.0
    %567 = vmatpush1.xpose.msra.mxu0 0.0
    %568 = vmatprep.subr.mxu0 0.0
    %569 = vmatpush1.xpose.msra.mxu0 0.0
    %570 = vmatprep.subr.mxu0 0.0
    %571 = vmatpush1.xpose.msra.mxu0 0.0
    %572 = vmatprep.subr.mxu0 0.0
    %573 = vmatpush1.xpose.msra.mxu0 0.0
    %574 = vmatprep.subr.mxu0 0.0
    %575 = vmatpush1.xpose.msra.mxu0 0.0
    %576 = vmatprep.subr.mxu0 0.0
    %577 = vmatpush1.xpose.msra.mxu0 0.0
    %578 = vmatprep.subr.mxu0 0.0
    %579 = vmatpush1.xpose.msra.mxu0 0.0
    %580 = vmatprep.subr.mxu0 0.0
    %581 = vmatpush1.xpose.msra.mxu0 0.0
    %582 = vmatprep.subr.mxu0 0.0
    %583 = vmatpush1.xpose.msra.mxu0 0.0
    %584 = vmatprep.subr.mxu0 0.0
    %585 = vmatpush1.xpose.msra.mxu0 0.0
    %586 = vmatprep.subr.mxu0 0.0
    %587 = vmatpush1.xpose.msra.mxu0 0.0
    %588 = vmatprep.subr.mxu0 0.0
    %589 = vmatpush1.xpose.msra.mxu0 0.0
    %590 = vmatprep.subr.mxu0 0.0
    %591 = vmatpush1.xpose.msra.mxu0 %v560
    %592 = vmatprep.subr.mxu0 0.0
    %593 = vmatpush1.xpose.msra.mxu0 %v558
    %594 = vmatprep.subr.mxu0 0.0
    %595 = vmatpush2.xpose.msra.mxu0 0.0
    %596 = vmatprep.subr.mxu0 0.0
    %597 = vmatpush2.xpose.msra.mxu0 0.0
    %598 = vmatprep.subr.mxu0 0.0
    %599 = vmatpush2.xpose.msra.mxu0 0.0
    %600 = vmatprep.subr.mxu0 0.0
    %601 = vmatpush2.xpose.msra.mxu0 0.0
    %602 = vmatprep.subr.mxu0 0.0
    %603 = vmatpush2.xpose.msra.mxu0 0.0
    %604 = vmatprep.subr.mxu0 0.0
    %605 = vmatpush2.xpose.msra.mxu0 0.0
    %606 = vmatprep.subr.mxu0 0.0
    %607 = vmatpush2.xpose.msra.mxu0 0.0
    %608 = vmatprep.subr.mxu0 0.0
    %609 = vmatpush2.xpose.msra.mxu0 0.0
    %610 = vmatprep.subr.mxu0 0.0
    %611 = vmatpush2.xpose.msra.mxu0 0.0
    %612 = vmatprep.subr.mxu0 0.0
    %613 = vmatpush2.xpose.msra.mxu0 0.0
    %614 = vmatprep.subr.mxu0 0.0
    %615 = vmatpush2.xpose.msra.mxu0 0.0
    %616 = vmatprep.subr.mxu0 0.0
    %617 = vmatpush2.xpose.msra.mxu0 0.0
    %618 = vmatprep.subr.mxu0 0.0
    %619 = vmatpush2.xpose.msra.mxu0 0.0
    %620 = vmatprep.subr.mxu0 0.0
    %621 = vmatpush2.xpose.msra.mxu0 0.0
    %622 = vmatprep.subr.mxu0 0.0
    %623 = vmatpush2.xpose.msra.mxu0 0.0
    %624 = vmatprep.subr.mxu0 0.0
    %625 = vmatpush2.xpose.msra.mxu0 0.0
    %626 = vmatprep.mubr.f32.mxu0 0.0
    %627 = vmatmul.mubr.f32.gmra.mxu0 %v554
    %v628 = vpop.f32.mrf.mxu0
    %v629 = vadd.f32 %v30, %v628
    %v630 = vpop.f32.mrf.mxu0
    %631 = vmatprep.mubr.f32.mxu0 0.0
    %632 = vmatmul.mubr.f32.gmra.mxu0 %v556
    %v633 = vpop.f32.mrf.mxu0
    %v634 = vadd.f32 %v31, %v633
    %v635 = vpop.f32.mrf.mxu0
    %636 = vdwg.mxu0
    %v637 = vsel %vm236, %v629, -inf
    %638 = vmax.xlane.f32.xlu0 %v637
    %v639 = vpop.xlane.xlu0 %638
    %v640 = vsel %vm236, %v634, -inf
    %641 = vmax.xlane.f32.xlu0 %v640
    %v642 = vpop.xlane.xlu0 %641
    %v643 = vsub.f32 %v629, %v639
    %v644 = vsub.f32 %v634, %v642
    %v645 = vmul.f32 %v643, 1.442695
    %v646 = vpow.pop %v645
    %v647 = vmul.f32 %v644, 1.442695
    %v648 = vpow.pop %v647
    %v649 = vsel %vm236, %v646, 0.0
    %650 = vadd.xlane.f32.xlu0 %v649
    %v651 = vpop.xlane.xlu0 %650
    %v652 = vsel %vm236, %v648, 0.0
    %653 = vadd.xlane.f32.xlu0 %v652
    %v654 = vpop.xlane.xlu0 %653
    %v655 = vrcp.pop %v651
    %v656 = vmul.f32 %v646, %v655
    %v657 = vrcp.pop %v654
    %v658 = vmul.f32 %v648, %v657
    %659 = vrot.lane.b32.xlu0 %v138, 48
    %v660 = vpop.permute.xlu0 %659
    %661 = vrot.lane.b32.xlu0 %v143, 48
    %v662 = vpop.permute.xlu0 %661
    %v666 = vsel %vm236, %v656, 0
    %v669 = vsel %vm236, %v658, 0
    %671 = vmatprep.subr.mxu0 0.0
    %672 = vmatpush1.msra.mxu0 0.0
    %673 = vmatprep.subr.mxu0 0.0
    %674 = vmatpush1.msra.mxu0 0.0
    %675 = vmatprep.subr.mxu0 0.0
    %676 = vmatpush1.msra.mxu0 0.0
    %677 = vmatprep.subr.mxu0 0.0
    %678 = vmatpush1.msra.mxu0 0.0
    %679 = vmatprep.subr.mxu0 0.0
    %680 = vmatpush1.msra.mxu0 0.0
    %681 = vmatprep.subr.mxu0 0.0
    %682 = vmatpush1.msra.mxu0 0.0
    %683 = vmatprep.subr.mxu0 0.0
    %684 = vmatpush1.msra.mxu0 0.0
    %685 = vmatprep.subr.mxu0 0.0
    %686 = vmatpush1.msra.mxu0 0.0
    %687 = vmatprep.subr.mxu0 0.0
    %688 = vmatpush1.msra.mxu0 0.0
    %689 = vmatprep.subr.mxu0 0.0
    %690 = vmatpush1.msra.mxu0 0.0
    %691 = vmatprep.subr.mxu0 0.0
    %692 = vmatpush1.msra.mxu0 0.0
    %693 = vmatprep.subr.mxu0 0.0
    %694 = vmatpush1.msra.mxu0 0.0
    %695 = vmatprep.subr.mxu0 0.0
    %696 = vmatpush1.msra.mxu0 0.0
    %697 = vmatprep.subr.mxu0 0.0
    %698 = vmatpush1.msra.mxu0 0.0
    %699 = vmatprep.subr.mxu0 0.0
    %700 = vmatpush1.msra.mxu0 %v662
    %701 = vmatprep.subr.mxu0 0.0
    %702 = vmatpush1.msra.mxu0 %v660
    %703 = vmatprep.subr.mxu0 0.0
    %704 = vmatpush2.msra.mxu0 0.0
    %705 = vmatprep.subr.mxu0 0.0
    %706 = vmatpush2.msra.mxu0 0.0
    %707 = vmatprep.subr.mxu0 0.0
    %708 = vmatpush2.msra.mxu0 0.0
    %709 = vmatprep.subr.mxu0 0.0
    %710 = vmatpush2.msra.mxu0 0.0
    %711 = vmatprep.subr.mxu0 0.0
    %712 = vmatpush2.msra.mxu0 0.0
    %713 = vmatprep.subr.mxu0 0.0
    %714 = vmatpush2.msra.mxu0 0.0
    %715 = vmatprep.subr.mxu0 0.0
    %716 = vmatpush2.msra.mxu0 0.0
    %717 = vmatprep.subr.mxu0 0.0
    %718 = vmatpush2.msra.mxu0 0.0
    %719 = vmatprep.subr.mxu0 0.0
    %720 = vmatpush2.msra.mxu0 0.0
    %721 = vmatprep.subr.mxu0 0.0
    %722 = vmatpush2.msra.mxu0 0.0
    %723 = vmatprep.subr.mxu0 0.0
    %724 = vmatpush2.msra.mxu0 0.0
    %725 = vmatprep.subr.mxu0 0.0
    %726 = vmatpush2.msra.mxu0 0.0
    %727 = vmatprep.subr.mxu0 0.0
    %728 = vmatpush2.msra.mxu0 0.0
    %729 = vmatprep.subr.mxu0 0.0
    %730 = vmatpush2.msra.mxu0 0.0
    %731 = vmatprep.subr.mxu0 0.0
    %732 = vmatpush2.msra.mxu0 0.0
    %733 = vmatprep.subr.mxu0 0.0
    %734 = vmatpush2.msra.mxu0 0.0
    %735 = vmatprep.mubr.f32.mxu0 0.0
    %736 = vmatmul.mubr.f32.gmra.mxu0 %v666
    %v737 = vpop.f32.mrf.mxu0
    %v738 = vadd.f32 0.0, %v737
    %v739 = vpop.f32.mrf.mxu0
    %740 = vmatprep.mubr.f32.mxu0 0.0
    %741 = vmatmul.mubr.f32.gmra.mxu0 %v669
    %v742 = vpop.f32.mrf.mxu0
    %v743 = vadd.f32 0.0, %v742
    %v744 = vpop.f32.mrf.mxu0
    %745 = vdwg.mxu0
    %746 = vrot.lane.b32.xlu0 %v138, 104
    %v747 = vpop.permute.xlu0 %746
    %748 = vrot.lane.b32.xlu0 %v143, 104
    %v749 = vpop.permute.xlu0 %748
    %750 = vrot.lane.b32.xlu0 %v138, 72
    %v751 = vpop.permute.xlu0 %750
    %752 = vrot.lane.b32.xlu0 %v143, 72
    %v753 = vpop.permute.xlu0 %752
    %v754 = vsel %vm152, %v747, 0
    %v756 = vsel %vm152, %v749, 0
    %v758 = vsel %vm152, %v751, 0
    %v760 = vsel %vm152, %v753, 0
    %762 = vmatprep.subr.mxu0 0.0
    %763 = vmatpush1.xpose.msra.mxu0 0.0
    %764 = vmatprep.subr.mxu0 0.0
    %765 = vmatpush1.xpose.msra.mxu0 0.0
    %766 = vmatprep.subr.mxu0 0.0
    %767 = vmatpush1.xpose.msra.mxu0 0.0
    %768 = vmatprep.subr.mxu0 0.0
    %769 = vmatpush1.xpose.msra.mxu0 0.0
    %770 = vmatprep.subr.mxu0 0.0
    %771 = vmatpush1.xpose.msra.mxu0 0.0
    %772 = vmatprep.subr.mxu0 0.0
    %773 = vmatpush1.xpose.msra.mxu0 0.0
    %774 = vmatprep.subr.mxu0 0.0
    %775 = vmatpush1.xpose.msra.mxu0 0.0
    %776 = vmatprep.subr.mxu0 0.0
    %777 = vmatpush1.xpose.msra.mxu0 0.0
    %778 = vmatprep.subr.mxu0 0.0
    %779 = vmatpush1.xpose.msra.mxu0 0.0
    %780 = vmatprep.subr.mxu0 0.0
    %781 = vmatpush1.xpose.msra.mxu0 0.0
    %782 = vmatprep.subr.mxu0 0.0
    %783 = vmatpush1.xpose.msra.mxu0 0.0
    %784 = vmatprep.subr.mxu0 0.0
    %785 = vmatpush1.xpose.msra.mxu0 0.0
    %786 = vmatprep.subr.mxu0 0.0
    %787 = vmatpush1.xpose.msra.mxu0 0.0
    %788 = vmatprep.subr.mxu0 0.0
    %789 = vmatpush1.xpose.msra.mxu0 0.0
    %790 = vmatprep.subr.mxu0 0.0
    %791 = vmatpush1.xpose.msra.mxu0 %v760
    %792 = vmatprep.subr.mxu0 0.0
    %793 = vmatpush1.xpose.msra.mxu0 %v758
    %794 = vmatprep.subr.mxu0 0.0
    %795 = vmatpush2.xpose.msra.mxu0 0.0
    %796 = vmatprep.subr.mxu0 0.0
    %797 = vmatpush2.xpose.msra.mxu0 0.0
    %798 = vmatprep.subr.mxu0 0.0
    %799 = vmatpush2.xpose.msra.mxu0 0.0
    %800 = vmatprep.subr.mxu0 0.0
    %801 = vmatpush2.xpose.msra.mxu0 0.0
    %802 = vmatprep.subr.mxu0 0.0
    %803 = vmatpush2.xpose.msra.mxu0 0.0
    %804 = vmatprep.subr.mxu0 0.0
    %805 = vmatpush2.xpose.msra.mxu0 0.0
    %806 = vmatprep.subr.mxu0 0.0
    %807 = vmatpush2.xpose.msra.mxu0 0.0
    %808 = vmatprep.subr.mxu0 0.0
    %809 = vmatpush2.xpose.msra.mxu0 0.0
    %810 = vmatprep.subr.mxu0 0.0
    %811 = vmatpush2.xpose.msra.mxu0 0.0
    %812 = vmatprep.subr.mxu0 0.0
    %813 = vmatpush2.xpose.msra.mxu0 0.0
    %814 = vmatprep.subr.mxu0 0.0
    %815 = vmatpush2.xpose.msra.mxu0 0.0
    %816 = vmatprep.subr.mxu0 0.0
    %817 = vmatpush2.xpose.msra.mxu0 0.0
    %818 = vmatprep.subr.mxu0 0.0
    %819 = vmatpush2.xpose.msra.mxu0 0.0
    %820 = vmatprep.subr.mxu0 0.0
    %821 = vmatpush2.xpose.msra.mxu0 0.0
    %822 = vmatprep.subr.mxu0 0.0
    %823 = vmatpush2.xpose.msra.mxu0 0.0
    %824 = vmatprep.subr.mxu0 0.0
    %825 = vmatpush2.xpose.msra.mxu0 0.0
    %826 = vmatprep.mubr.f32.mxu0 0.0
    %827 = vmatmul.mubr.f32.gmra.mxu0 %v754
    %v828 = vpop.f32.mrf.mxu0
    %v829 = vadd.f32 %v30, %v828
    %v830 = vpop.f32.mrf.mxu0
    %831 = vmatprep.mubr.f32.mxu0 0.0
    %832 = vmatmul.mubr.f32.gmra.mxu0 %v756
    %v833 = vpop.f32.mrf.mxu0
    %v834 = vadd.f32 %v31, %v833
    %v835 = vpop.f32.mrf.mxu0
    %836 = vdwg.mxu0
    %v837 = vsel %vm236, %v829, -inf
    %838 = vmax.xlane.f32.xlu0 %v837
    %v839 = vpop.xlane.xlu0 %838
    %v840 = vsel %vm236, %v834, -inf
    %841 = vmax.xlane.f32.xlu0 %v840
    %v842 = vpop.xlane.xlu0 %841
    %v843 = vsub.f32 %v829, %v839
    %v844 = vsub.f32 %v834, %v842
    %v845 = vmul.f32 %v843, 1.442695
    %v846 = vpow.pop %v845
    %v847 = vmul.f32 %v844, 1.442695
    %v848 = vpow.pop %v847
    %v849 = vsel %vm236, %v846, 0.0
    %850 = vadd.xlane.f32.xlu0 %v849
    %v851 = vpop.xlane.xlu0 %850
    %v852 = vsel %vm236, %v848, 0.0
    %853 = vadd.xlane.f32.xlu0 %v852
    %v854 = vpop.xlane.xlu0 %853
    %v855 = vrcp.pop %v851
    %v856 = vmul.f32 %v846, %v855
    %v857 = vrcp.pop %v854
    %v858 = vmul.f32 %v848, %v857
    %859 = vrot.lane.b32.xlu0 %v138, 40
    %v860 = vpop.permute.xlu0 %859
    %861 = vrot.lane.b32.xlu0 %v143, 40
    %v862 = vpop.permute.xlu0 %861
    %v866 = vsel %vm236, %v856, 0
    %v869 = vsel %vm236, %v858, 0
    %871 = vmatprep.subr.mxu0 0.0
    %872 = vmatpush1.msra.mxu0 0.0
    %873 = vmatprep.subr.mxu0 0.0
    %874 = vmatpush1.msra.mxu0 0.0
    %875 = vmatprep.subr.mxu0 0.0
    %876 = vmatpush1.msra.mxu0 0.0
    %877 = vmatprep.subr.mxu0 0.0
    %878 = vmatpush1.msra.mxu0 0.0
    %879 = vmatprep.subr.mxu0 0.0
    %880 = vmatpush1.msra.mxu0 0.0
    %881 = vmatprep.subr.mxu0 0.0
    %882 = vmatpush1.msra.mxu0 0.0
    %883 = vmatprep.subr.mxu0 0.0
    %884 = vmatpush1.msra.mxu0 0.0
    %885 = vmatprep.subr.mxu0 0.0
    %886 = vmatpush1.msra.mxu0 0.0
    %887 = vmatprep.subr.mxu0 0.0
    %888 = vmatpush1.msra.mxu0 0.0
    %889 = vmatprep.subr.mxu0 0.0
    %890 = vmatpush1.msra.mxu0 0.0
    %891 = vmatprep.subr.mxu0 0.0
    %892 = vmatpush1.msra.mxu0 0.0
    %893 = vmatprep.subr.mxu0 0.0
    %894 = vmatpush1.msra.mxu0 0.0
    %895 = vmatprep.subr.mxu0 0.0
    %896 = vmatpush1.msra.mxu0 0.0
    %897 = vmatprep.subr.mxu0 0.0
    %898 = vmatpush1.msra.mxu0 0.0
    %899 = vmatprep.subr.mxu0 0.0
    %900 = vmatpush1.msra.mxu0 %v862
    %901 = vmatprep.subr.mxu0 0.0
    %902 = vmatpush1.msra.mxu0 %v860
    %903 = vmatprep.subr.mxu0 0.0
    %904 = vmatpush2.msra.mxu0 0.0
    %905 = vmatprep.subr.mxu0 0.0
    %906 = vmatpush2.msra.mxu0 0.0
    %907 = vmatprep.subr.mxu0 0.0
    %908 = vmatpush2.msra.mxu0 0.0
    %909 = vmatprep.subr.mxu0 0.0
    %910 = vmatpush2.msra.mxu0 0.0
    %911 = vmatprep.subr.mxu0 0.0
    %912 = vmatpush2.msra.mxu0 0.0
    %913 = vmatprep.subr.mxu0 0.0
    %914 = vmatpush2.msra.mxu0 0.0
    %915 = vmatprep.subr.mxu0 0.0
    %916 = vmatpush2.msra.mxu0 0.0
    %917 = vmatprep.subr.mxu0 0.0
    %918 = vmatpush2.msra.mxu0 0.0
    %919 = vmatprep.subr.mxu0 0.0
    %920 = vmatpush2.msra.mxu0 0.0
    %921 = vmatprep.subr.mxu0 0.0
    %922 = vmatpush2.msra.mxu0 0.0
    %923 = vmatprep.subr.mxu0 0.0
    %924 = vmatpush2.msra.mxu0 0.0
    %925 = vmatprep.subr.mxu0 0.0
    %926 = vmatpush2.msra.mxu0 0.0
    %927 = vmatprep.subr.mxu0 0.0
    %928 = vmatpush2.msra.mxu0 0.0
    %929 = vmatprep.subr.mxu0 0.0
    %930 = vmatpush2.msra.mxu0 0.0
    %931 = vmatprep.subr.mxu0 0.0
    %932 = vmatpush2.msra.mxu0 0.0
    %933 = vmatprep.subr.mxu0 0.0
    %934 = vmatpush2.msra.mxu0 0.0
    %935 = vmatprep.mubr.f32.mxu0 0.0
    %936 = vmatmul.mubr.f32.gmra.mxu0 %v866
    %v937 = vpop.f32.mrf.mxu0
    %v938 = vadd.f32 0.0, %v937
    %v939 = vpop.f32.mrf.mxu0
    %940 = vmatprep.mubr.f32.mxu0 0.0
    %941 = vmatmul.mubr.f32.gmra.mxu0 %v869
    %v942 = vpop.f32.mrf.mxu0
    %v943 = vadd.f32 0.0, %v942
    %v944 = vpop.f32.mrf.mxu0
    %945 = vdwg.mxu0
    %948 = vrot.lane.b32.xlu0 %v538, 8
    %v949 = vpop.permute.xlu0 %948
    %950 = vrot.lane.b32.xlu0 %v543, 8
    %v951 = vpop.permute.xlu0 %950
    %956 = vrot.lane.b32.xlu0 %v738, 16
    %v957 = vpop.permute.xlu0 %956
    %958 = vrot.lane.b32.xlu0 %v743, 16
    %v959 = vpop.permute.xlu0 %958
    %964 = vrot.lane.b32.xlu0 %v938, 24
    %v965 = vpop.permute.xlu0 %964
    %966 = vrot.lane.b32.xlu0 %v943, 24
    %v967 = vpop.permute.xlu0 %966
    %v970 = vsel %vm152, %v338, %v949
    %v971 = vsel %vm152, %v343, %v951
    %v972 = vsel %vm236, %v970, %v957
    %v973 = vsel %vm236, %v971, %v959
    %vm974 = vcmask 195584
    %v975 = vsel %vm974, %v972, %v965
    %v976 = vsel %vm974, %v973, %v967
    %v977 = vlaneseq
    %v978 = vshrl.u32 %v977, 7
    %v979 = vsub.s32 0, %v978
    %v980 = vrot.slane %v53, %v979
    %v982 = vsel %vm64, %v975, 0
    %v985 = vsel %vm64, %v976, 0
    %987 = vmatprep.subr.mxu0 0.0
    %988 = vmatpush1.msra.mxu0 0.0
    %989 = vmatprep.subr.mxu0 0.0
    %990 = vmatpush1.msra.mxu0 0.0
    %991 = vmatprep.subr.mxu0 0.0
    %992 = vmatpush1.msra.mxu0 0.0
    %993 = vmatprep.subr.mxu0 0.0
    %994 = vmatpush1.msra.mxu0 0.0
    %995 = vmatprep.subr.mxu0 0.0
    %996 = vmatpush1.msra.mxu0 0.0
    %997 = vmatprep.subr.mxu0 0.0
    %998 = vmatpush1.msra.mxu0 0.0
    %999 = vmatprep.subr.mxu0 0.0
    %1000 = vmatpush1.msra.mxu0 0.0
    %1001 = vmatprep.subr.mxu0 0.0
    %1002 = vmatpush1.msra.mxu0 0.0
    %1003 = vmatprep.subr.mxu0 0.0
    %1004 = vmatpush1.msra.mxu0 0.0
    %1005 = vmatprep.subr.mxu0 0.0
    %1006 = vmatpush1.msra.mxu0 0.0
    %1007 = vmatprep.subr.mxu0 0.0
    %1008 = vmatpush1.msra.mxu0 0.0
    %1009 = vmatprep.subr.mxu0 0.0
    %1010 = vmatpush1.msra.mxu0 0.0
    %1011 = vmatprep.subr.mxu0 0.0
    %1012 = vmatpush1.msra.mxu0 %v51
    %1013 = vmatprep.subr.mxu0 0.0
    %1014 = vmatpush1.msra.mxu0 %v50
    %1015 = vmatprep.subr.mxu0 0.0
    %1016 = vmatpush1.msra.mxu0 %v49
    %1017 = vmatprep.subr.mxu0 0.0
    %1018 = vmatpush1.msra.mxu0 %v48
    %1019 = vmatprep.subr.mxu0 0.0
    %1020 = vmatpush2.msra.mxu0 0.0
    %1021 = vmatprep.subr.mxu0 0.0
    %1022 = vmatpush2.msra.mxu0 0.0
    %1023 = vmatprep.subr.mxu0 0.0
    %1024 = vmatpush2.msra.mxu0 0.0
    %1025 = vmatprep.subr.mxu0 0.0
    %1026 = vmatpush2.msra.mxu0 0.0
    %1027 = vmatprep.subr.mxu0 0.0
    %1028 = vmatpush2.msra.mxu0 0.0
    %1029 = vmatprep.subr.mxu0 0.0
    %1030 = vmatpush2.msra.mxu0 0.0
    %1031 = vmatprep.subr.mxu0 0.0
    %1032 = vmatpush2.msra.mxu0 0.0
    %1033 = vmatprep.subr.mxu0 0.0
    %1034 = vmatpush2.msra.mxu0 0.0
    %1035 = vmatprep.subr.mxu0 0.0
    %1036 = vmatpush2.msra.mxu0 0.0
    %1037 = vmatprep.subr.mxu0 0.0
    %1038 = vmatpush2.msra.mxu0 0.0
    %1039 = vmatprep.subr.mxu0 0.0
    %1040 = vmatpush2.msra.mxu0 0.0
    %1041 = vmatprep.subr.mxu0 0.0
    %1042 = vmatpush2.msra.mxu0 0.0
    %1043 = vmatprep.subr.mxu0 0.0
    %1044 = vmatpush2.msra.mxu0 0.0
    %1045 = vmatprep.subr.mxu0 0.0
    %1046 = vmatpush2.msra.mxu0 0.0
    %1047 = vmatprep.subr.mxu0 0.0
    %1048 = vmatpush2.msra.mxu0 0.0
    %1049 = vmatprep.subr.mxu0 0.0
    %1050 = vmatpush2.msra.mxu0 0.0
    %1051 = vmatprep.mubr.f32.mxu0 0.0
    %1052 = vmatmul.mubr.f32.gmra.mxu0 %v982
    %v1053 = vpop.f32.mrf.mxu0
    %v1054 = vadd.f32 %v980, %v1053
    %v1055 = vpop.f32.mrf.mxu0
    %1056 = vmatprep.mubr.f32.mxu0 0.0
    %1057 = vmatmul.mubr.f32.gmra.mxu0 %v985
    %v1058 = vpop.f32.mrf.mxu0
    %v1059 = vadd.f32 %v980, %v1058
    %v1060 = vpop.f32.mrf.mxu0
    %1061 = vdwg.mxu0
    %v1062 = vadd.f32 %v1054, %v28
    %v1063 = vadd.f32 %v1059, %v29
    %v1064 = vsel %vm64, %v1062, 0.0
    %1065 = vadd.xlane.f32.xlu0 %v1064
    %v1066 = vpop.xlane.xlu0 %1065
    %v1067 = vsel %vm64, %v1063, 0.0
    %1068 = vadd.xlane.f32.xlu0 %v1067
    %v1069 = vpop.xlane.xlu0 %1068
    %v1070 = vrcp.pop 32.0
    %v1071 = vmul.f32 %v1066, %v1070
    %v1072 = vmul.f32 %v1069, %v1070
    %v1073 = vsub.f32 %v1062, %v1071
    %v1074 = vsub.f32 %v1063, %v1072
    %v1075 = vmul.f32 %v1073, %v1073
    %v1076 = vmul.f32 %v1074, %v1074
    %v1077 = vsel %vm64, %v1075, 0.0
    %1078 = vadd.xlane.f32.xlu0 %v1077
    %v1079 = vpop.xlane.xlu0 %1078
    %v1080 = vsel %vm64, %v1076, 0.0
    %1081 = vadd.xlane.f32.xlu0 %v1080
    %v1082 = vpop.xlane.xlu0 %1081
    %v1083 = vmul.f32 %v1079, %v1070
    %v1084 = vmul.f32 %v1082, %v1070
    %v1085 = vadd.f32 %v1083, 1e-05
    %v1086 = vadd.f32 %v1084, 1e-05
    %v1087 = vrsqrt.pop %v1085
    %v1088 = vrsqrt.pop %v1086
    %v1089 = vmul.f32 %v1073, %v1087
    %v1090 = vmul.f32 %v1074, %v1088
    %v1091 = vlaneseq
    %v1092 = vshrl.u32 %v1091, 7
    %v1093 = vsub.s32 0, %v1092
    %v1094 = vrot.slane %v56, %v1093
    %v1095 = vmul.f32 %v1089, %v1094
    %v1096 = vmul.f32 %v1090, %v1094
    %v1097 = vlaneseq
    %v1098 = vshrl.u32 %v1097, 7
    %v1099 = vsub.s32 0, %v1098
    %v1100 = vrot.slane %v57, %v1099
    %v1101 = vadd.f32 %v1095, %v1100
    %v1102 = vadd.f32 %v1096, %v1100
    %v1103 = vlaneseq
    %v1104 = vshrl.u32 %v1103, 7
    %v1105 = vsub.s32 0, %v1104
    %v1106 = vrot.slane %v54, %v1105
    %v1108 = vsel %vm64, %v1101, 0
    %v1111 = vsel %vm64, %v1102, 0
    %1113 = vmatprep.subr.mxu0 0.0
    %1114 = vmatpush1.msra.mxu0 0.0
    %1115 = vmatprep.subr.mxu0 0.0
    %1116 = vmatpush1.msra.mxu0 0.0
    %1117 = vmatprep.subr.mxu0 0.0
    %1118 = vmatpush1.msra.mxu0 0.0
    %1119 = vmatprep.subr.mxu0 0.0
    %1120 = vmatpush1.msra.mxu0 0.0
    %1121 = vmatprep.subr.mxu0 0.0
    %1122 = vmatpush1.msra.mxu0 0.0
    %1123 = vmatprep.subr.mxu0 0.0
    %1124 = vmatpush1.msra.mxu0 0.0
    %1125 = vmatprep.subr.mxu0 0.0
    %1126 = vmatpush1.msra.mxu0 0.0
    %1127 = vmatprep.subr.mxu0 0.0
    %1128 = vmatpush1.msra.mxu0 0.0
    %1129 = vmatprep.subr.mxu0 0.0
    %1130 = vmatpush1.msra.mxu0 0.0
    %1131 = vmatprep.subr.mxu0 0.0
    %1132 = vmatpush1.msra.mxu0 0.0
    %1133 = vmatprep.subr.mxu0 0.0
    %1134 = vmatpush1.msra.mxu0 0.0
    %1135 = vmatprep.subr.mxu0 0.0
    %1136 = vmatpush1.msra.mxu0 0.0
    %1137 = vmatprep.subr.mxu0 0.0
    %1138 = vmatpush1.msra.mxu0 %v39
    %1139 = vmatprep.subr.mxu0 0.0
    %1140 = vmatpush1.msra.mxu0 %v38
    %1141 = vmatprep.subr.mxu0 0.0
    %1142 = vmatpush1.msra.mxu0 %v37
    %1143 = vmatprep.subr.mxu0 0.0
    %1144 = vmatpush1.msra.mxu0 %v36
    %1145 = vmatprep.subr.mxu0 0.0
    %1146 = vmatpush2.msra.mxu0 0.0
    %1147 = vmatprep.subr.mxu0 0.0
    %1148 = vmatpush2.msra.mxu0 0.0
    %1149 = vmatprep.subr.mxu0 0.0
    %1150 = vmatpush2.msra.mxu0 0.0
    %1151 = vmatprep.subr.mxu0 0.0
    %1152 = vmatpush2.msra.mxu0 0.0
    %1153 = vmatprep.subr.mxu0 0.0
    %1154 = vmatpush2.msra.mxu0 0.0
    %1155 = vmatprep.subr.mxu0 0.0
    %1156 = vmatpush2.msra.mxu0 0.0
    %1157 = vmatprep.subr.mxu0 0.0
    %1158 = vmatpush2.msra.mxu0 0.0
    %1159 = vmatprep.subr.mxu0 0.0
    %1160 = vmatpush2.msra.mxu0 0.0
    %1161 = vmatprep.subr.mxu0 0.0
    %1162 = vmatpush2.msra.mxu0 0.0
    %1163 = vmatprep.subr.mxu0 0.0
    %1164 = vmatpush2.msra.mxu0 0.0
    %1165 = vmatprep.subr.mxu0 0.0
    %1166 = vmatpush2.msra.mxu0 0.0
    %1167 = vmatprep.subr.mxu0 0.0
    %1168 = vmatpush2.msra.mxu0 0.0
    %1169 = vmatprep.subr.mxu0 0.0
    %1170 = vmatpush2.msra.mxu0 0.0
    %1171 = vmatprep.subr.mxu0 0.0
    %1172 = vmatpush2.msra.mxu0 0.0
    %1173 = vmatprep.subr.mxu0 0.0
    %1174 = vmatpush2.msra.mxu0 0.0
    %1175 = vmatprep.subr.mxu0 0.0
    %1176 = vmatpush2.msra.mxu0 0.0
    %1177 = vmatprep.mubr.f32.mxu0 0.0
    %1178 = vmatmul.mubr.f32.gmra.mxu0 %v1108
    %v1179 = vpop.f32.mrf.mxu0
    %v1180 = vadd.f32 %v1106, %v1179
    %v1181 = vpop.f32.mrf.mxu0
    %1182 = vmatprep.mubr.f32.mxu0 0.0
    %1183 = vmatmul.mubr.f32.gmra.mxu0 %v1111
    %v1184 = vpop.f32.mrf.mxu0
    %v1185 = vadd.f32 %v1106, %v1184
    %v1186 = vpop.f32.mrf.mxu0
    %1187 = vdwg.mxu0
    %v1188 = vmax.f32 %v1180, 0.0
    %v1189 = vmax.f32 %v1185, 0.0
    %v1190 = vlaneseq
    %v1191 = vshrl.u32 %v1190, 7
    %v1192 = vsub.s32 0, %v1191
    %v1193 = vrot.slane %v55, %v1192
    %vm1194 = vcmask 523264
    %v1196 = vsel %vm1194, %v1188, 0
    %v1199 = vsel %vm1194, %v1189, 0
    %1201 = vmatprep.subr.mxu0 0.0
    %1202 = vmatpush1.msra.mxu0 0.0
    %1203 = vmatprep.subr.mxu0 0.0
    %1204 = vmatpush1.msra.mxu0 0.0
    %1205 = vmatprep.subr.mxu0 0.0
    %1206 = vmatpush1.msra.mxu0 0.0
    %1207 = vmatprep.subr.mxu0 0.0
    %1208 = vmatpush1.msra.mxu0 0.0
    %1209 = vmatprep.subr.mxu0 0.0
    %1210 = vmatpush1.msra.mxu0 0.0
    %1211 = vmatprep.subr.mxu0 0.0
    %1212 = vmatpush1.msra.mxu0 0.0
    %1213 = vmatprep.subr.mxu0 0.0
    %1214 = vmatpush1.msra.mxu0 0.0
    %1215 = vmatprep.subr.mxu0 0.0
    %1216 = vmatpush1.msra.mxu0 0.0
    %1217 = vmatprep.subr.mxu0 0.0
    %1218 = vmatpush1.msra.mxu0 %v47
    %1219 = vmatprep.subr.mxu0 0.0
    %1220 = vmatpush1.msra.mxu0 %v46
    %1221 = vmatprep.subr.mxu0 0.0
    %1222 = vmatpush1.msra.mxu0 %v45
    %1223 = vmatprep.subr.mxu0 0.0
    %1224 = vmatpush1.msra.mxu0 %v44
    %1225 = vmatprep.subr.mxu0 0.0
    %1226 = vmatpush1.msra.mxu0 %v43
    %1227 = vmatprep.subr.mxu0 0.0
    %1228 = vmatpush1.msra.mxu0 %v42
    %1229 = vmatprep.subr.mxu0 0.0
    %1230 = vmatpush1.msra.mxu0 %v41
    %1231 = vmatprep.subr.mxu0 0.0
    %1232 = vmatpush1.msra.mxu0 %v40
    %1233 = vmatprep.subr.mxu0 0.0
    %1234 = vmatpush2.msra.mxu0 0.0
    %1235 = vmatprep.subr.mxu0 0.0
    %1236 = vmatpush2.msra.mxu0 0.0
    %1237 = vmatprep.subr.mxu0 0.0
    %1238 = vmatpush2.msra.mxu0 0.0
    %1239 = vmatprep.subr.mxu0 0.0
    %1240 = vmatpush2.msra.mxu0 0.0
    %1241 = vmatprep.subr.mxu0 0.0
    %1242 = vmatpush2.msra.mxu0 0.0
    %1243 = vmatprep.subr.mxu0 0.0
    %1244 = vmatpush2.msra.mxu0 0.0
    %1245 = vmatprep.subr.mxu0 0.0
    %1246 = vmatpush2.msra.mxu0 0.0
    %1247 = vmatprep.subr.mxu0 0.0
    %1248 = vmatpush2.msra.mxu0 0.0
    %1249 = vmatprep.subr.mxu0 0.0
    %1250 = vmatpush2.msra.mxu0 0.0
    %1251 = vmatprep.subr.mxu0 0.0
    %1252 = vmatpush2.msra.mxu0 0.0
    %1253 = vmatprep.subr.mxu0 0.0
    %1254 = vmatpush2.msra.mxu0 0.0
    %1255 = vmatprep.subr.mxu0 0.0
    %1256 = vmatpush2.msra.mxu0 0.0
    %1257 = vmatprep.subr.mxu0 0.0
    %1258 = vmatpush2.msra.mxu0 0.0
    %1259 = vmatprep.subr.mxu0 0.0
    %1260 = vmatpush2.msra.mxu0 0.0
    %1261 = vmatprep.subr.mxu0 0.0
    %1262 = vmatpush2.msra.mxu0 0.0
    %1263 = vmatprep.subr.mxu0 0.0
    %1264 = vmatpush2.msra.mxu0 0.0
    %1265 = vmatprep.mubr.f32.mxu0 0.0
    %1266 = vmatmul.mubr.f32.gmra.mxu0 %v1196
    %v1267 = vpop.f32.mrf.mxu0
    %v1268 = vadd.f32 %v1193, %v1267
    %v1269 = vpop.f32.mrf.mxu0
    %1270 = vmatprep.mubr.f32.mxu0 0.0
    %1271 = vmatmul.mubr.f32.gmra.mxu0 %v1199
    %v1272 = vpop.f32.mrf.mxu0
    %v1273 = vadd.f32 %v1193, %v1272
    %v1274 = vpop.f32.mrf.mxu0
    %1275 = vdwg.mxu0
    %v1276 = vadd.f32 %v1268, %v1101
    %v1277 = vadd.f32 %v1273, %v1102
    %v1278 = vsel %vm64, %v1276, 0.0
    %1279 = vadd.xlane.f32.xlu0 %v1278
    %v1280 = vpop.xlane.xlu0 %1279
    %v1281 = vsel %vm64, %v1277, 0.0
    %1282 = vadd.xlane.f32.xlu0 %v1281
    %v1283 = vpop.xlane.xlu0 %1282
    %v1284 = vmul.f32 %v1280, %v1070
    %v1285 = vmul.f32 %v1283, %v1070
    %v1286 = vsub.f32 %v1276, %v1284
    %v1287 = vsub.f32 %v1277, %v1285
    %v1288 = vmul.f32 %v1286, %v1286
    %v1289 = vmul.f32 %v1287, %v1287
    %v1290 = vsel %vm64, %v1288, 0.0
    %1291 = vadd.xlane.f32.xlu0 %v1290
    %v1292 = vpop.xlane.xlu0 %1291
    %v1293 = vsel %vm64, %v1289, 0.0
    %1294 = vadd.xlane.f32.xlu0 %v1293
    %v1295 = vpop.xlane.xlu0 %1294
    %v1296 = vmul.f32 %v1292, %v1070
    %v1297 = vmul.f32 %v1295, %v1070
    %v1298 = vadd.f32 %v1296, 1e-05
    %v1299 = vadd.f32 %v1297, 1e-05
    %v1300 = vrsqrt.pop %v1298
    %v1301 = vrsqrt.pop %v1299
    %v1302 = vmul.f32 %v1286, %v1300
    %v1303 = vmul.f32 %v1287, %v1301
    %v1304 = vlaneseq
    %v1305 = vshrl.u32 %v1304, 7
    %v1306 = vsub.s32 0, %v1305
    %v1307 = vrot.slane %v58, %v1306
    %v1308 = vmul.f32 %v1302, %v1307
    %v1309 = vmul.f32 %v1303, %v1307
    %v1310 = vlaneseq
    %v1311 = vshrl.u32 %v1310, 7
    %v1312 = vsub.s32 0, %v1311
    %v1313 = vrot.slane %v59, %v1312
    %v1314 = vadd.f32 %v1308, %v1313
    %v1315 = vadd.f32 %v1309, %v1313
    %1316 = vst.msk [vmem:[%s3] sm:$0xff] %vm64, %v1314
    %1317 = vst.msk [vmem:[%s3 + $0x8] sm:$0xff] %vm64, %v1315
    // Predicated region
    $region18: #{transformer_encoder_layer.1} parent=1 // pred_check
      _
    $region19: #{transformer_encoder_layer.1} parent=1 // pred_check_branch
      %1319 = sbr.rel (0) target = $region21
    $region20: #{transformer_encoder_layer.1} parent=1 // pred_region
      _
    $region21: #{transformer_encoder_layer.1} parent=1 // pred_fallthru
      _
    // Predicated region
    $region22: #{transformer_encoder_layer.1} parent=1 // pred_check
      _
    $region23: #{transformer_encoder_layer.1} parent=1 // pred_check_branch
      %1321 = sbr.rel (0) target = $region25
    $region24: #{transformer_encoder_layer.1} parent=1 // pred_region
      _
    $region25: #{transformer_encoder_layer.1} parent=1 // pred_fallthru
      _
    %1322 = vsyncpa [#allocation3], 1

</llo_original>
